<compile_context>
chip_gen: v6e
topology: v6e:2x2x1
jax: 0.10.0
libtpu: 0.0.40
codegen_flags: <defaults>
</compile_context>

<pallas_src>
import jax
import jax.numpy as jnp
from jax.experimental import pallas as pl
from jax.experimental.pallas import tpu as pltpu


def _leaky_relu(x, slope=0.2):
    return jnp.where(x > 0, x, slope * x)


def _round_up(x, m):
    return (x + m - 1) // m * m


def gen_kernel(x_ref,
               w1_ref, b1_ref,
               w2_ref, b2_ref,
               w3_ref, b3_ref,
               w4_ref, b4_ref,
               o_ref,
               h3_ref):
    """Fused Generator MLP.

    Grid = (batch tiles, output-column tiles). Layers 1-3 are computed once per
    batch tile (j == 0) into the h3 VMEM scratch; layer 4 + tanh run per column
    tile of w4 / out. BatchNorm is already folded into w2/b2 and w3/b3.
    """
    j = pl.program_id(1)

    @pl.when(j == 0)
    def _():
        x = x_ref[...]                                                   # bf16
        h = jnp.dot(x, w1_ref[...],
                    preferred_element_type=jnp.float32) + b1_ref[...]
        h = _leaky_relu(h)

        h = jnp.dot(h.astype(jnp.bfloat16), w2_ref[...],
                    preferred_element_type=jnp.float32) + b2_ref[...]    # BN2 folded
        h = _leaky_relu(h)

        h = jnp.dot(h.astype(jnp.bfloat16), w3_ref[...],
                    preferred_element_type=jnp.float32) + b3_ref[...]    # BN3 folded
        h = _leaky_relu(h)

        h3_ref[...] = h.astype(jnp.bfloat16)

    out = jnp.dot(h3_ref[...], w4_ref[...],
                  preferred_element_type=jnp.float32) + b4_ref[...]
    o_ref[...] = jnp.tanh(out).astype(o_ref.dtype)                       # bf16 store


def prepare_params(params, *, eps=1e-5, max_tile_n=2048):
    """One-time parameter preparation: BN folding, bf16 cast, lane-dense padding.

    Call once; pass the result to generator_forward() for every forward call.
    Accepts biases / BN vectors as either 1-D or (1, N).
    """
    f32, bf16 = jnp.float32, jnp.bfloat16
    z_dim = params["w1"].shape[0]
    data_dim = params["w4"].shape[1]

    zp = _round_up(z_dim, 128)                       # lane-dense layer-1 K dim
    dp = _round_up(data_dim, 128)                    # lane-dense output dim
    tile_n = dp if dp <= max_tile_n else max_tile_n  # column tile for layer 4
    dpp = _round_up(dp, tile_n)

    # Eval-mode BatchNorm1d as y = s * x + t, folded into the preceding Linear.
    s2 = (params["bn2_gamma"] / jnp.sqrt(params["bn2_var"] + eps)).astype(f32).reshape(-1)
    t2 = (params["bn2_beta"].reshape(-1) - params["bn2_mean"].reshape(-1) * s2).astype(f32)
    s3 = (params["bn3_gamma"] / jnp.sqrt(params["bn3_var"] + eps)).astype(f32).reshape(-1)
    t3 = (params["bn3_beta"].reshape(-1) - params["bn3_mean"].reshape(-1) * s3).astype(f32)

    w1 = jnp.zeros((zp, 256), bf16).at[:z_dim, :].set(params["w1"].astype(bf16))
    b1 = params["b1"].reshape(1, 256).astype(f32)

    w2 = (params["w2"].astype(f32) * s2[None, :]).astype(bf16)
    b2 = (params["b2"].reshape(1, 512).astype(f32) * s2[None, :] + t2[None, :])

    w3 = (params["w3"].astype(f32) * s3[None, :]).astype(bf16)
    b3 = (params["b3"].reshape(1, 1024).astype(f32) * s3[None, :] + t3[None, :])

    w4 = jnp.zeros((1024, dpp), bf16).at[:, :data_dim].set(params["w4"].astype(bf16))
    b4 = jnp.zeros((1, dpp), f32).at[:, :data_dim].set(
        params["b4"].reshape(1, -1).astype(f32))

    return dict(w1=w1, b1=b1, w2=w2, b2=b2, w3=w3, b3=b3, w4=w4, b4=b4,
                z_dim=z_dim, zp=zp, data_dim=data_dim, dpp=dpp, tile_n=tile_n)


def generator_forward(x, pp, *, tile_b=512):
    """x: (B, z_dim) float32. pp: output of prepare_params(). Returns (B, data_dim) f32."""
    B = x.shape[0]
    z_dim, zp = pp["z_dim"], pp["zp"]
    data_dim, dpp, tile_n = pp["data_dim"], pp["dpp"], pp["tile_n"]
    bf16 = jnp.bfloat16

    # Batch tiling: multiples of 8; for small/medium batches cap the tile so the
    # parallel batch axis has >= 2 grid steps (lets v7x shard across both TCs).
    B8 = _round_up(B, 8)
    tb = min(tile_b, B8)
    if B8 <= 1024:
        tb = min(tb, _round_up(pl.cdiv(B8, 2), 8))
    tb = max(8, _round_up(tb, 8))
    Bp = _round_up(B8, tb)

    xp = jnp.zeros((Bp, zp), bf16).at[:B, :z_dim].set(x.astype(bf16))

    grid_b = Bp // tb
    grid_n = dpp // tile_n
    grid = (grid_b, grid_n)

    w1, b1 = pp["w1"], pp["b1"]
    w2, b2 = pp["w2"], pp["b2"]
    w3, b3 = pp["w3"], pp["b3"]
    w4, b4 = pp["w4"], pp["b4"]

    # Resident (constant index_map) params: single-buffer, no wasted VMEM copy.
    def resident(a):
        return pl.BlockSpec(a.shape, lambda i, j: (0, 0),
                            pipeline_mode=pl.Buffered(1))

    w4_mode = pl.Buffered(1) if grid_n == 1 else pl.Buffered(2)
    w4_spec = pl.BlockSpec((1024, tile_n), lambda i, j: (0, j), pipeline_mode=w4_mode)
    b4_spec = pl.BlockSpec((1, tile_n), lambda i, j: (0, j), pipeline_mode=w4_mode)

    x_spec = pl.BlockSpec((tb, zp), lambda i, j: (i, 0))
    o_spec = pl.BlockSpec((tb, tile_n), lambda i, j: (i, j))

    # Explicit VMEM budget from the actual footprint (+50% headroom), capped at
    # the smallest physical VMEM across targets (v7x: 64 MiB per TC).
    n_w4_buf = 2 if grid_n > 1 else 1
    footprint = (2 * tb * zp * 2                                   # x, double buffer
                 + 2 * tb * tile_n * 2                             # out (bf16), double buffer
                 + (zp * 256 + 256 * 512 + 512 * 1024) * 2         # resident weights x1
                 + (256 + 512 + 1024) * 4 * 8                      # biases (sublane padded)
                 + n_w4_buf * (1024 * tile_n * 2 + tile_n * 4 * 8) # w4 / b4 tiles
                 + tb * 1024 * 2                                   # h3 scratch (bf16)
                 + 4 * tb * 1024 * 4)                              # f32 intermediates headroom
    vmem_limit = min(int(footprint * 1.5) + (2 << 20), 64 << 20)

    flops = 2 * Bp * (zp * 256 + 256 * 512 + 512 * 1024 + 1024 * dpp)
    bytes_accessed = (xp.size * 2 + Bp * dpp * 2
                      + (w1.size + w2.size + w3.size + w4.size) * 2
                      + (b1.size + b2.size + b3.size + b4.size) * 4)

    out_p = pl.pallas_call(
        gen_kernel,
        out_shape=jax.ShapeDtypeStruct((Bp, dpp), bf16),
        grid_spec=pltpu.PrefetchScalarGridSpec(
            num_scalar_prefetch=0,
            grid=grid,
            in_specs=[
                x_spec,
                resident(w1), resident(b1),
                resident(w2), resident(b2),
                resident(w3), resident(b3),
                w4_spec, b4_spec,
            ],
            out_specs=o_spec,
            scratch_shapes=[pltpu.VMEM((tb, 1024), bf16)],   # layer-3 activations
        ),
        compiler_params=pltpu.CompilerParams(
            dimension_semantics=("parallel", "arbitrary"),
            vmem_limit_bytes=vmem_limit),
        cost_estimate=pl.CostEstimate(
            flops=int(flops),
            transcendentals=int(Bp * dpp),
            bytes_accessed=int(bytes_accessed)),
    )(xp, w1, b1, w2, b2, w3, b3, w4, b4)

    # Slice back to real batch / features; return f32 like the torch module.
    return out_p[:B, :data_dim].astype(jnp.float32)


def init_params(key, z_dim, data_dim):
    """Deterministic init mirroring torch defaults (Linear U[-1/sqrt(fan_in),+],
    BatchNorm with synthetic running stats for the eval-mode forward)."""
    ks = jax.random.split(key, 16)

    def linear(kw, kb, fan_in, fan_out):
        bound = 1.0 / jnp.sqrt(jnp.float32(fan_in))
        w = jax.random.uniform(kw, (fan_in, fan_out), jnp.float32, -bound, bound)
        b = jax.random.uniform(kb, (1, fan_out), jnp.float32, -bound, bound)
        return w, b

    w1, b1 = linear(ks[0], ks[1], z_dim, 256)
    w2, b2 = linear(ks[2], ks[3], 256, 512)
    w3, b3 = linear(ks[4], ks[5], 512, 1024)
    w4, b4 = linear(ks[6], ks[7], 1024, data_dim)

    def bn(kg, kb_, km, kv, n):
        gamma = jax.random.uniform(kg, (n,), jnp.float32, 0.5, 1.5)
        beta = 0.1 * jax.random.normal(kb_, (n,), jnp.float32)
        mean = 0.1 * jax.random.normal(km, (n,), jnp.float32)
        var = jax.random.uniform(kv, (n,), jnp.float32, 0.5, 1.5)
        return gamma, beta, mean, var

    g2, be2, m2, v2 = bn(ks[8], ks[9], ks[10], ks[11], 512)
    g3, be3, m3, v3 = bn(ks[12], ks[13], ks[14], ks[15], 1024)
    return dict(w1=w1, b1=b1, w2=w2, b2=b2, w3=w3, b3=b3, w4=w4, b4=b4,
                bn2_gamma=g2, bn2_beta=be2, bn2_mean=m2, bn2_var=v2,
                bn3_gamma=g3, bn3_beta=be3, bn3_mean=m3, bn3_var=v3)


def reference_forward(x, p, eps=1e-5):
    h = _leaky_relu(x @ p["w1"] + p["b1"])
    y = h @ p["w2"] + p["b2"]
    y = (y - p["bn2_mean"]) / jnp.sqrt(p["bn2_var"] + eps) * p["bn2_gamma"] + p["bn2_beta"]
    h = _leaky_relu(y)
    y = h @ p["w3"] + p["b3"]
    y = (y - p["bn3_mean"]) / jnp.sqrt(p["bn3_var"] + eps) * p["bn3_gamma"] + p["bn3_beta"]
    h = _leaky_relu(y)
    return jnp.tanh(h @ p["w4"] + p["b4"])


if __name__ == "__main__":
    key = jax.random.PRNGKey(0)
    k_x, k_p = jax.random.split(key)

    B, z_dim, data_dim = 8, 64, 32
    x = jax.random.normal(k_x, (B, z_dim), jnp.float32)
    params = init_params(k_p, z_dim, data_dim)

    # One-time param prep (BN fold + bf16 cast + padding); reused every forward.
    prepped = prepare_params(params)

    out = generator_forward(x, prepped)
    out = jax.block_until_ready(out)

    ref = reference_forward(x, params)
    assert out.shape == (B, data_dim), out.shape
    max_err = jnp.max(jnp.abs(out - ref))
    # bf16 matmul inputs / bf16 output with f32 accumulation -> ~1e-2 level diffs.
    assert jnp.allclose(out, ref, atol=5e-2, rtol=5e-2), f"max abs err {max_err}"

    print("KERNEL_OK")
</pallas_src>

<mosaic_0001>
module attributes {stable_mosaic.version = 11 : i64} {
  func.func @gen_kernel(%arg0: i32, %arg1: i32, %arg2: memref<8x128xbf16, #tpu.memory_space<vmem>>, %arg3: memref<128x256xbf16, #tpu.memory_space<vmem>>, %arg4: memref<1x256xf32, #tpu.memory_space<vmem>>, %arg5: memref<256x512xbf16, #tpu.memory_space<vmem>>, %arg6: memref<1x512xf32, #tpu.memory_space<vmem>>, %arg7: memref<512x1024xbf16, #tpu.memory_space<vmem>>, %arg8: memref<1x1024xf32, #tpu.memory_space<vmem>>, %arg9: memref<1024x128xbf16, #tpu.memory_space<vmem>>, %arg10: memref<1x128xf32, #tpu.memory_space<vmem>>, %arg11: memref<8x128xbf16, #tpu.memory_space<vmem>>, %arg12: memref<8x1024xbf16, #tpu.memory_space<vmem>>) attributes {dimension_semantics = [#tpu.dimension_semantics<parallel>, #tpu.dimension_semantics<arbitrary>], iteration_bounds = array<i64: 1, 1>, scalar_prefetch = 0 : i64, scratch_operands = 1 : i64, tpu.core_type = #tpu.core_type<tc>, window_params = [{transform_indices = @transform_0, window_bounds = array<i64: 8, 128>}, {pipeline_mode = #tpu.pipeline_mode<synchronous>, transform_indices = @transform_1, window_bounds = array<i64: 128, 256>}, {pipeline_mode = #tpu.pipeline_mode<synchronous>, transform_indices = @transform_2, window_bounds = array<i64: 1, 256>}, {pipeline_mode = #tpu.pipeline_mode<synchronous>, transform_indices = @transform_3, window_bounds = array<i64: 256, 512>}, {pipeline_mode = #tpu.pipeline_mode<synchronous>, transform_indices = @transform_4, window_bounds = array<i64: 1, 512>}, {pipeline_mode = #tpu.pipeline_mode<synchronous>, transform_indices = @transform_5, window_bounds = array<i64: 512, 1024>}, {pipeline_mode = #tpu.pipeline_mode<synchronous>, transform_indices = @transform_6, window_bounds = array<i64: 1, 1024>}, {pipeline_mode = #tpu.pipeline_mode<synchronous>, transform_indices = @transform_7, window_bounds = array<i64: 1024, 128>}, {pipeline_mode = #tpu.pipeline_mode<synchronous>, transform_indices = @transform_8, window_bounds = array<i64: 1, 128>}, {transform_indices = @transform_9, window_bounds = array<i64: 8, 128>}]} {
    %c0_i32 = arith.constant 0 : i32
    %0 = arith.cmpi eq, %arg1, %c0_i32 : i32
    %1 = arith.extui %0 : i1 to i32
    %c0_i32_0 = arith.constant 0 : i32
    %2 = arith.cmpi ne, %1, %c0_i32_0 : i32
    scf.if %2 {
      %c0_8 = arith.constant 0 : index
      %c0_9 = arith.constant 0 : index
      %12 = vector.load %arg2[%c0_8, %c0_9] : memref<8x128xbf16, #tpu.memory_space<vmem>>, vector<8x128xbf16>
      %c0_10 = arith.constant 0 : index
      %c0_11 = arith.constant 0 : index
      %13 = vector.load %arg3[%c0_10, %c0_11] : memref<128x256xbf16, #tpu.memory_space<vmem>>, vector<128x256xbf16>
      %cst_12 = arith.constant dense<0.000000e+00> : vector<8x256xf32>
      %14 = tpu.matmul %12, %13, %cst_12 {dimension_numbers = #tpu.dot_dimension_numbers<[1], [0], [0], [1], [0, 0, 1, 1], [], []>} : vector<8x128xbf16>, vector<128x256xbf16>, vector<8x256xf32> -> vector<8x256xf32>
      %c0_13 = arith.constant 0 : index
      %c0_14 = arith.constant 0 : index
      %15 = vector.load %arg4[%c0_13, %c0_14] : memref<1x256xf32, #tpu.memory_space<vmem>>, vector<1x256xf32>
      %16 = vector.broadcast %15 : vector<1x256xf32> to vector<8x256xf32>
      %17 = arith.addf %14, %16 : vector<8x256xf32>
      %cst_15 = arith.constant 0.000000e+00 : f32
      %18 = vector.broadcast %cst_15 : f32 to vector<8x256xf32>
      %19 = arith.cmpf ogt, %17, %18 : vector<8x256xf32>
      %cst_16 = arith.constant 2.000000e-01 : f32
      %20 = vector.broadcast %cst_16 : f32 to vector<8x256xf32>
      %21 = arith.mulf %20, %17 : vector<8x256xf32>
      %22 = arith.select %19, %17, %21 : vector<8x256xi1>, vector<8x256xf32>
      %23 = arith.truncf %22 : vector<8x256xf32> to vector<8x256xbf16>
      %c0_17 = arith.constant 0 : index
      %c0_18 = arith.constant 0 : index
      %24 = vector.load %arg5[%c0_17, %c0_18] : memref<256x512xbf16, #tpu.memory_space<vmem>>, vector<256x512xbf16>
      %cst_19 = arith.constant dense<0.000000e+00> : vector<8x512xf32>
      %25 = tpu.matmul %23, %24, %cst_19 {dimension_numbers = #tpu.dot_dimension_numbers<[1], [0], [0], [1], [0, 0, 1, 1], [], []>} : vector<8x256xbf16>, vector<256x512xbf16>, vector<8x512xf32> -> vector<8x512xf32>
      %c0_20 = arith.constant 0 : index
      %c0_21 = arith.constant 0 : index
      %26 = vector.load %arg6[%c0_20, %c0_21] : memref<1x512xf32, #tpu.memory_space<vmem>>, vector<1x512xf32>
      %27 = vector.broadcast %26 : vector<1x512xf32> to vector<8x512xf32>
      %28 = arith.addf %25, %27 : vector<8x512xf32>
      %cst_22 = arith.constant 0.000000e+00 : f32
      %29 = vector.broadcast %cst_22 : f32 to vector<8x512xf32>
      %30 = arith.cmpf ogt, %28, %29 : vector<8x512xf32>
      %cst_23 = arith.constant 2.000000e-01 : f32
      %31 = vector.broadcast %cst_23 : f32 to vector<8x512xf32>
      %32 = arith.mulf %31, %28 : vector<8x512xf32>
      %33 = arith.select %30, %28, %32 : vector<8x512xi1>, vector<8x512xf32>
      %34 = arith.truncf %33 : vector<8x512xf32> to vector<8x512xbf16>
      %c0_24 = arith.constant 0 : index
      %c0_25 = arith.constant 0 : index
      %35 = vector.load %arg7[%c0_24, %c0_25] : memref<512x1024xbf16, #tpu.memory_space<vmem>>, vector<512x1024xbf16>
      %cst_26 = arith.constant dense<0.000000e+00> : vector<8x1024xf32>
      %36 = tpu.matmul %34, %35, %cst_26 {dimension_numbers = #tpu.dot_dimension_numbers<[1], [0], [0], [1], [0, 0, 1, 1], [], []>} : vector<8x512xbf16>, vector<512x1024xbf16>, vector<8x1024xf32> -> vector<8x1024xf32>
      %c0_27 = arith.constant 0 : index
      %c0_28 = arith.constant 0 : index
      %37 = vector.load %arg8[%c0_27, %c0_28] : memref<1x1024xf32, #tpu.memory_space<vmem>>, vector<1x1024xf32>
      %38 = vector.broadcast %37 : vector<1x1024xf32> to vector<8x1024xf32>
      %39 = arith.addf %36, %38 : vector<8x1024xf32>
      %cst_29 = arith.constant 0.000000e+00 : f32
      %40 = vector.broadcast %cst_29 : f32 to vector<8x1024xf32>
      %41 = arith.cmpf ogt, %39, %40 : vector<8x1024xf32>
      %cst_30 = arith.constant 2.000000e-01 : f32
      %42 = vector.broadcast %cst_30 : f32 to vector<8x1024xf32>
      %43 = arith.mulf %42, %39 : vector<8x1024xf32>
      %44 = arith.select %41, %39, %43 : vector<8x1024xi1>, vector<8x1024xf32>
      %45 = arith.truncf %44 : vector<8x1024xf32> to vector<8x1024xbf16>
      %c0_31 = arith.constant 0 : index
      %c0_32 = arith.constant 0 : index
      %46 = vector.load %arg12[%c0_31, %c0_32] : memref<8x1024xbf16, #tpu.memory_space<vmem>>, vector<8x1024xbf16>
      tpu.vector_store %arg12[%c0_31, %c0_32], %45 {strides = array<i32>} : memref<8x1024xbf16, #tpu.memory_space<vmem>>, vector<8x1024xbf16>,
    } else {
    }
    %c0 = arith.constant 0 : index
    %c0_1 = arith.constant 0 : index
    %3 = vector.load %arg12[%c0, %c0_1] : memref<8x1024xbf16, #tpu.memory_space<vmem>>, vector<8x1024xbf16>
    %c0_2 = arith.constant 0 : index
    %c0_3 = arith.constant 0 : index
    %4 = vector.load %arg9[%c0_2, %c0_3] : memref<1024x128xbf16, #tpu.memory_space<vmem>>, vector<1024x128xbf16>
    %cst = arith.constant dense<0.000000e+00> : vector<8x128xf32>
    %5 = tpu.matmul %3, %4, %cst {dimension_numbers = #tpu.dot_dimension_numbers<[1], [0], [0], [1], [0, 0, 1, 1], [], []>} : vector<8x1024xbf16>, vector<1024x128xbf16>, vector<8x128xf32> -> vector<8x128xf32>
    %c0_4 = arith.constant 0 : index
    %c0_5 = arith.constant 0 : index
    %6 = vector.load %arg10[%c0_4, %c0_5] : memref<1x128xf32, #tpu.memory_space<vmem>>, vector<1x128xf32>
    %7 = vector.broadcast %6 : vector<1x128xf32> to vector<8x128xf32>
    %8 = arith.addf %5, %7 : vector<8x128xf32>
    %9 = math.tanh %8 : vector<8x128xf32>
    %10 = arith.truncf %9 : vector<8x128xf32> to vector<8x128xbf16>
    %c0_6 = arith.constant 0 : index
    %c0_7 = arith.constant 0 : index
    %11 = vector.load %arg11[%c0_6, %c0_7] : memref<8x128xbf16, #tpu.memory_space<vmem>>, vector<8x128xbf16>
    tpu.vector_store %arg11[%c0_6, %c0_7], %10 {strides = array<i32>} : memref<8x128xbf16, #tpu.memory_space<vmem>>, vector<8x128xbf16>,
    return
  }
  func.func @transform_0(%arg0: i32, %arg1: i32) -> (i32, i32) {
    %c0_i32 = arith.constant 0 : i32
    %c0_i32_0 = arith.constant 0 : i32
    return %arg0, %c0_i32 : i32, i32
  }
  func.func @transform_1(%arg0: i32, %arg1: i32) -> (i32, i32) {
    %c0_i32 = arith.constant 0 : i32
    %c0_i32_0 = arith.constant 0 : i32
    %c0_i32_1 = arith.constant 0 : i32
    return %c0_i32, %c0_i32_0 : i32, i32
  }
  func.func @transform_2(%arg0: i32, %arg1: i32) -> (i32, i32) {
    %c0_i32 = arith.constant 0 : i32
    %c0_i32_0 = arith.constant 0 : i32
    %c0_i32_1 = arith.constant 0 : i32
    return %c0_i32, %c0_i32_0 : i32, i32
  }
  func.func @transform_3(%arg0: i32, %arg1: i32) -> (i32, i32) {
    %c0_i32 = arith.constant 0 : i32
    %c0_i32_0 = arith.constant 0 : i32
    %c0_i32_1 = arith.constant 0 : i32
    return %c0_i32, %c0_i32_0 : i32, i32
  }
  func.func @transform_4(%arg0: i32, %arg1: i32) -> (i32, i32) {
    %c0_i32 = arith.constant 0 : i32
    %c0_i32_0 = arith.constant 0 : i32
    %c0_i32_1 = arith.constant 0 : i32
    return %c0_i32, %c0_i32_0 : i32, i32
  }
  func.func @transform_5(%arg0: i32, %arg1: i32) -> (i32, i32) {
    %c0_i32 = arith.constant 0 : i32
    %c0_i32_0 = arith.constant 0 : i32
    %c0_i32_1 = arith.constant 0 : i32
    return %c0_i32, %c0_i32_0 : i32, i32
  }
  func.func @transform_6(%arg0: i32, %arg1: i32) -> (i32, i32) {
    %c0_i32 = arith.constant 0 : i32
    %c0_i32_0 = arith.constant 0 : i32
    %c0_i32_1 = arith.constant 0 : i32
    return %c0_i32, %c0_i32_0 : i32, i32
  }
  func.func @transform_7(%arg0: i32, %arg1: i32) -> (i32, i32) {
    %c0_i32 = arith.constant 0 : i32
    %c0_i32_0 = arith.constant 0 : i32
    return %c0_i32, %arg1 : i32, i32
  }
  func.func @transform_8(%arg0: i32, %arg1: i32) -> (i32, i32) {
    %c0_i32 = arith.constant 0 : i32
    %c0_i32_0 = arith.constant 0 : i32
    return %c0_i32, %arg1 : i32, i32
  }
  func.func @transform_9(%arg0: i32, %arg1: i32) -> (i32, i32) {
    %c0_i32 = arith.constant 0 : i32
    return %arg0, %arg1 : i32, i32
  }
}

</mosaic_0001>

<llo_original>
// kernel: tpu_custom_call.1
$region0: #{tpu_custom_call.1}
  #allocation0 [shape = 'u32[]', space=smem, size = 0x4, offset = 0x4, fixed_abs, tag = 'smem constant byte address 0x4 - core index']
  #allocation1 [shape = 'u32[144,128]{1,0:T(1,128)}', space=vmem, size = 0x12000, scoped, tag = 'internal scratch']
  #allocation2 [shape = 'bf16[8,1024]{1,0:T(8,128)(2,1)}', space=vmem, size = 0x4000, scoped, tag = 'scratch operand']
  %s0 = inlined_call_operand.hbm [shape: bf16[8,128], index: 0, kind: input, shape index: {}]
  %s1 = inlined_call_operand.hbm [shape: bf16[128,256], index: 1, kind: input, shape index: {}]
  %s2 = inlined_call_operand.vmem [shape: f32[1,256], index: 2, kind: input, shape index: {}]
  %s3 = inlined_call_operand.hbm [shape: bf16[256,512], index: 3, kind: input, shape index: {}]
  %s4 = inlined_call_operand.hbm [shape: f32[1,512], index: 4, kind: input, shape index: {}]
  %s5 = inlined_call_operand.hbm [shape: bf16[512,1024], index: 5, kind: input, shape index: {}]
  %s6 = inlined_call_operand.vmem [shape: f32[1,1024], index: 6, kind: input, shape index: {}]
  %s7 = inlined_call_operand.hbm [shape: bf16[1024,128], index: 7, kind: input, shape index: {}]
  %s8 = inlined_call_operand.vmem [shape: f32[1,128], index: 8, kind: input, shape index: {}]
  %s9 = inlined_call_operand.hbm [shape: bf16[8,128], index: 9, kind: output, shape index: {}]
  %s10 = sld [smem:[#allocation0]]
  $region74: #{tpu_custom_call.1} parent=0
    _
  %s12 = ssub.s32 1, %s10
  %s13 = scalar_select 0, %s12, %s10
  $region1: #{tpu_custom_call.1} parent=0
    #allocation3 [shape = 'u8[2048]{0}', space=vmem, size = 0x800, scoped, tag = 'input window, operand 0, single buffered']
    #allocation4 [shape = 's32[1]{0}', space=sflag, size = 0x4, scoped, tag = 'scoped memory for tpu_custom_call.1']
    #allocation5 [shape = 's32[1]{0}', space=sflag, size = 0x4, scoped, tag = 'scoped memory for tpu_custom_call.1']
    #allocation6 [shape = 'u8[65536]{0}', space=vmem, size = 0x10000, scoped, tag = 'input window, operand 1, single buffered']
    #allocation7 [shape = 's32[1]{0}', space=sflag, size = 0x4, scoped, tag = 'scoped memory for tpu_custom_call.1']
    #allocation8 [shape = 'u8[262144]{0}', space=vmem, size = 0x40000, scoped, tag = 'input window, operand 3, single buffered']
    #allocation9 [shape = 'u8[2048]{0}', space=vmem, size = 0x800, scoped, tag = 'input window, operand 4, single buffered']
    #allocation10 [shape = 's32[1]{0}', space=sflag, size = 0x4, scoped, tag = 'scoped memory for tpu_custom_call.1']
    #allocation11 [shape = 'u8[1048576]{0}', space=vmem, size = 0x100000, scoped, tag = 'input window, operand 5, single buffered']
    #allocation12 [shape = 'u8[262144]{0}', space=vmem, size = 0x40000, scoped, tag = 'input window, operand 7, single buffered']
    #allocation13 [shape = 's32[1]{0}', space=sflag, size = 0x4, scoped, tag = 'scoped memory for tpu_custom_call.1']
    #allocation14 [shape = 'u8[2048]{0}', space=vmem, size = 0x800, scoped, tag = 'output window, operand 0, single buffered']
    %14 = vsyncpa [#allocation4], 0
    %15 = vsyncpa [#allocation7], 0
    %16 = vsyncpa [#allocation10], 0
    %17 = vsyncpa [#allocation13], 0
    %18 = vsyncpa [#allocation5], 0
    // Predicated region
    $region2: #{tpu_custom_call.1} parent=1 // pred_check
      _
    $region3: #{tpu_custom_call.1} parent=1 // pred_check_branch
      %20 = sbr.rel (0) target = $region5
    $region4: #{tpu_custom_call.1} parent=1 // pred_region
      %s22 = ssub.s32 64, 64
      %23 = vsyncadd [#allocation4], %s22
      %s25 = sshll.u32 [#allocation3], 4
      %s26 = int_to_ptr.vmem [resolvable:$true] %s25
      %28 = dma.hbm_to_vmem [thread:$0]  %s0, 64, %s26, [#allocation4]
    $region5: #{tpu_custom_call.1} parent=1 // pred_fallthru
      _
    // Predicated region
    $region6: #{tpu_custom_call.1} parent=1 // pred_check
      _
    $region7: #{tpu_custom_call.1} parent=1 // pred_check_branch
      %30 = sbr.rel (0) target = $region9
    $region8: #{tpu_custom_call.1} parent=1 // pred_region
      %s32 = ssub.s32 2048, 2048
      %33 = vsyncadd [#allocation7], %s32
      %s34 = sshll.u32 [#allocation6], 4
      %s35 = int_to_ptr.vmem [resolvable:$true] %s34
      %40 = dma.hbm_to_vmem [thread:$0]  %s1, 2048, %s35, [#allocation7], 128, 128, 8
    $region9: #{tpu_custom_call.1} parent=1 // pred_fallthru
      _
    // Predicated region
    $region10: #{tpu_custom_call.1} parent=1 // pred_check
      _
    $region11: #{tpu_custom_call.1} parent=1 // pred_check_branch
      %42 = sbr.rel (0) target = $region13
    $region12: #{tpu_custom_call.1} parent=1 // pred_region
      _
    $region13: #{tpu_custom_call.1} parent=1 // pred_fallthru
      _
    // Predicated region
    $region14: #{tpu_custom_call.1} parent=1 // pred_check
      _
    $region15: #{tpu_custom_call.1} parent=1 // pred_check_branch
      %44 = sbr.rel (0) target = $region17
    $region16: #{tpu_custom_call.1} parent=1 // pred_region
      %s46 = ssub.s32 8192, 8192
      %47 = vsyncadd [#allocation7], %s46
      %s48 = sshll.u32 [#allocation8], 4
      %s49 = int_to_ptr.vmem [resolvable:$true] %s48
      %54 = dma.hbm_to_vmem [thread:$0]  %s3, 8192, %s49, [#allocation7], 256, 256, 16
    $region17: #{tpu_custom_call.1} parent=1 // pred_fallthru
      _
    // Predicated region
    $region18: #{tpu_custom_call.1} parent=1 // pred_check
      _
    $region19: #{tpu_custom_call.1} parent=1 // pred_check_branch
      %56 = sbr.rel (0) target = $region21
    $region20: #{tpu_custom_call.1} parent=1 // pred_region
      %s58 = ssub.s32 64, 64
      %59 = vsyncadd [#allocation10], %s58
      %s61 = sshll.u32 [#allocation9], 4
      %s62 = int_to_ptr.vmem [resolvable:$true] %s61
      %64 = dma.hbm_to_vmem [thread:$0]  %s4, 64, %s62, [#allocation10]
    $region21: #{tpu_custom_call.1} parent=1 // pred_fallthru
      _
    // Predicated region
    $region22: #{tpu_custom_call.1} parent=1 // pred_check
      _
    $region23: #{tpu_custom_call.1} parent=1 // pred_check_branch
      %66 = sbr.rel (0) target = $region25
    $region24: #{tpu_custom_call.1} parent=1 // pred_region
      %s68 = ssub.s32 32768, 32768
      %69 = vsyncadd [#allocation10], %s68
      %s70 = sshll.u32 [#allocation11], 4
      %s71 = int_to_ptr.vmem [resolvable:$true] %s70
      %76 = dma.hbm_to_vmem [thread:$0]  %s5, 32768, %s71, [#allocation10], 512, 512, 32
    $region25: #{tpu_custom_call.1} parent=1 // pred_fallthru
      _
    // Predicated region
    $region26: #{tpu_custom_call.1} parent=1 // pred_check
      _
    $region27: #{tpu_custom_call.1} parent=1 // pred_check_branch
      %78 = sbr.rel (0) target = $region29
    $region28: #{tpu_custom_call.1} parent=1 // pred_region
      _
    $region29: #{tpu_custom_call.1} parent=1 // pred_fallthru
      _
    // Predicated region
    $region30: #{tpu_custom_call.1} parent=1 // pred_check
      _
    $region31: #{tpu_custom_call.1} parent=1 // pred_check_branch
      %80 = sbr.rel (0) target = $region33
    $region32: #{tpu_custom_call.1} parent=1 // pred_region
      %s82 = ssub.s32 8192, 8192
      %83 = vsyncadd [#allocation13], %s82
      %s84 = sshll.u32 [#allocation12], 4
      %s85 = int_to_ptr.vmem [resolvable:$true] %s84
      %90 = dma.hbm_to_vmem [thread:$0]  %s7, 8192, %s85, [#allocation13], 64, 64, 4
    $region33: #{tpu_custom_call.1} parent=1 // pred_fallthru
      _
    // Predicated region
    $region34: #{tpu_custom_call.1} parent=1 // pred_check
      _
    $region35: #{tpu_custom_call.1} parent=1 // pred_check_branch
      %92 = sbr.rel (0) target = $region37
    $region36: #{tpu_custom_call.1} parent=1 // pred_region
      _
    $region37: #{tpu_custom_call.1} parent=1 // pred_fallthru
      _
    // Predicated region
    $region38: #{tpu_custom_call.1} parent=1 // pred_check
      _
    $region39: #{tpu_custom_call.1} parent=1 // pred_check_branch
      %94 = sbr.rel (0) target = $region41
    $region40: #{tpu_custom_call.1} parent=1 // pred_region
      %95 = dma.done [#allocation4], 64
    $region41: #{tpu_custom_call.1} parent=1 // pred_fallthru
      _
    // Predicated region
    $region42: #{tpu_custom_call.1} parent=1 // pred_check
      _
    $region43: #{tpu_custom_call.1} parent=1 // pred_check_branch
      %97 = sbr.rel (0) target = $region45
    $region44: #{tpu_custom_call.1} parent=1 // pred_region
      %98 = dma.done [#allocation7], 2048
    $region45: #{tpu_custom_call.1} parent=1 // pred_fallthru
      _
    // Predicated region
    $region46: #{tpu_custom_call.1} parent=1 // pred_check
      _
    $region47: #{tpu_custom_call.1} parent=1 // pred_check_branch
      %100 = sbr.rel (0) target = $region49
    $region48: #{tpu_custom_call.1} parent=1 // pred_region
      %101 = dma.done [#allocation7], 8192
    $region49: #{tpu_custom_call.1} parent=1 // pred_fallthru
      _
    // Predicated region
    $region50: #{tpu_custom_call.1} parent=1 // pred_check
      _
    $region51: #{tpu_custom_call.1} parent=1 // pred_check_branch
      %103 = sbr.rel (0) target = $region53
    $region52: #{tpu_custom_call.1} parent=1 // pred_region
      %104 = dma.done [#allocation10], 64
    $region53: #{tpu_custom_call.1} parent=1 // pred_fallthru
      _
    // Predicated region
    $region54: #{tpu_custom_call.1} parent=1 // pred_check
      _
    $region55: #{tpu_custom_call.1} parent=1 // pred_check_branch
      %106 = sbr.rel (0) target = $region57
    $region56: #{tpu_custom_call.1} parent=1 // pred_region
      %107 = dma.done [#allocation10], 32768
    $region57: #{tpu_custom_call.1} parent=1 // pred_fallthru
      _
    // Predicated region
    $region58: #{tpu_custom_call.1} parent=1 // pred_check
      _
    $region59: #{tpu_custom_call.1} parent=1 // pred_check_branch
      %109 = sbr.rel (0) target = $region61
    $region60: #{tpu_custom_call.1} parent=1 // pred_region
      %110 = dma.done [#allocation13], 8192
    $region61: #{tpu_custom_call.1} parent=1 // pred_fallthru
      _
    %p112 = scmp.eq.s32.totalorder 0, 0
    // Predicated region
    $region62: #{tpu_custom_call.1} parent=1 // pred_check
      %p113 = pneg %p112
    $region63: #{tpu_custom_call.1} parent=1 // pred_check_branch
      %115 = sbr.rel (%p113) target = $region65
    $region64: #{tpu_custom_call.1} parent=1 // pred_region
      %v116 = vld [vmem:[#allocation3] sm:$0xf]
      %v117 = vld [vmem:[#allocation6] sm:$0xff]
      %v118 = vld [vmem:[#allocation6 + $0x8] sm:$0xff]
      %v119 = vld [vmem:[#allocation6 + $0x10] sm:$0xff]
      %v120 = vld [vmem:[#allocation6 + $0x18] sm:$0xff]
      %v121 = vld [vmem:[#allocation6 + $0x20] sm:$0xff]
      %v122 = vld [vmem:[#allocation6 + $0x28] sm:$0xff]
      %v123 = vld [vmem:[#allocation6 + $0x30] sm:$0xff]
      %v124 = vld [vmem:[#allocation6 + $0x38] sm:$0xff]
      %v125 = vld [vmem:[#allocation6 + $0x40] sm:$0xff]
      %v126 = vld [vmem:[#allocation6 + $0x48] sm:$0xff]
      %v127 = vld [vmem:[#allocation6 + $0x50] sm:$0xff]
      %v128 = vld [vmem:[#allocation6 + $0x58] sm:$0xff]
      %v129 = vld [vmem:[#allocation6 + $0x60] sm:$0xff]
      %v130 = vld [vmem:[#allocation6 + $0x68] sm:$0xff]
      %v131 = vld [vmem:[#allocation6 + $0x70] sm:$0xff]
      %v132 = vld [vmem:[#allocation6 + $0x78] sm:$0xff]
      %v133 = vld [vmem:[%s2] sm:$0x3]
      %v135 = vlaneseq
      %v136 = vshrl.u32 %v135, 7
      %v137 = vsub.s32 0, %v136
      %v138 = vrot.slane %v133, %v137
      %v139 = vlaneseq
      %v140 = vshrl.u32 %v139, 7
      %v141 = vsub.s32 1, %v140
      %v142 = vrot.slane %v133, %v141
      %v161 = vunpack.c.l.b16 %v117
      %v162 = vunpack.c.h.b16 %v117
      %v163 = vunpack.c.l.b16 %v118
      %v164 = vunpack.c.h.b16 %v118
      %v165 = vunpack.c.l.b16 %v119
      %v166 = vunpack.c.h.b16 %v119
      %v167 = vunpack.c.l.b16 %v120
      %v168 = vunpack.c.h.b16 %v120
      %v169 = vunpack.c.l.b16 %v121
      %v170 = vunpack.c.h.b16 %v121
      %v171 = vunpack.c.l.b16 %v122
      %v172 = vunpack.c.h.b16 %v122
      %v173 = vunpack.c.l.b16 %v123
      %v174 = vunpack.c.h.b16 %v123
      %v175 = vunpack.c.l.b16 %v124
      %v176 = vunpack.c.h.b16 %v124
      %v177 = vunpack.c.l.b16 %v125
      %v178 = vunpack.c.h.b16 %v125
      %v179 = vunpack.c.l.b16 %v126
      %v180 = vunpack.c.h.b16 %v126
      %v181 = vunpack.c.l.b16 %v127
      %v182 = vunpack.c.h.b16 %v127
      %v183 = vunpack.c.l.b16 %v128
      %v184 = vunpack.c.h.b16 %v128
      %v185 = vunpack.c.l.b16 %v129
      %v186 = vunpack.c.h.b16 %v129
      %v187 = vunpack.c.l.b16 %v130
      %v188 = vunpack.c.h.b16 %v130
      %v189 = vunpack.c.l.b16 %v131
      %v190 = vunpack.c.h.b16 %v131
      %v191 = vunpack.c.l.b16 %v132
      %v192 = vunpack.c.h.b16 %v132
      %v193 = vpack.c.b16 %v163, %v161
      %v194 = vpack.c.b16 %v164, %v162
      %v195 = vpack.c.b16 %v167, %v165
      %v196 = vpack.c.b16 %v168, %v166
      %v197 = vpack.c.b16 %v171, %v169
      %v198 = vpack.c.b16 %v172, %v170
      %v199 = vpack.c.b16 %v175, %v173
      %v200 = vpack.c.b16 %v176, %v174
      %v201 = vpack.c.b16 %v179, %v177
      %v202 = vpack.c.b16 %v180, %v178
      %v203 = vpack.c.b16 %v183, %v181
      %v204 = vpack.c.b16 %v184, %v182
      %v205 = vpack.c.b16 %v187, %v185
      %v206 = vpack.c.b16 %v188, %v186
      %v207 = vpack.c.b16 %v191, %v189
      %v208 = vpack.c.b16 %v192, %v190
      %225 = vmatprep.subr.bf16.mxu0 %v208
      %226 = vmatpush1.bf16.msra.mxu0 %v207
      %227 = vmatprep.subr.bf16.mxu0 %v206
      %228 = vmatpush1.bf16.msra.mxu0 %v205
      %229 = vmatprep.subr.bf16.mxu0 %v204
      %230 = vmatpush1.bf16.msra.mxu0 %v203
      %231 = vmatprep.subr.bf16.mxu0 %v202
      %232 = vmatpush1.bf16.msra.mxu0 %v201
      %233 = vmatprep.subr.bf16.mxu0 %v200
      %234 = vmatpush1.bf16.msra.mxu0 %v199
      %235 = vmatprep.subr.bf16.mxu0 %v198
      %236 = vmatpush1.bf16.msra.mxu0 %v197
      %237 = vmatprep.subr.bf16.mxu0 %v196
      %238 = vmatpush1.bf16.msra.mxu0 %v195
      %239 = vmatprep.subr.bf16.mxu0 %v194
      %240 = vmatpush1.bf16.msra.mxu0 %v193
      %241 = vmatprep.subr.bf16.mxu0 0
      %242 = vmatpush2.bf16.msra.mxu0 0
      %243 = vmatprep.subr.bf16.mxu0 0
      %244 = vmatpush2.bf16.msra.mxu0 0
      %245 = vmatprep.subr.bf16.mxu0 0
      %246 = vmatpush2.bf16.msra.mxu0 0
      %247 = vmatprep.subr.bf16.mxu0 0
      %248 = vmatpush2.bf16.msra.mxu0 0
      %249 = vmatprep.subr.bf16.mxu0 0
      %250 = vmatpush2.bf16.msra.mxu0 0
      %251 = vmatprep.subr.bf16.mxu0 0
      %252 = vmatpush2.bf16.msra.mxu0 0
      %253 = vmatprep.subr.bf16.mxu0 0
      %254 = vmatpush2.bf16.msra.mxu0 0
      %255 = vmatprep.subr.bf16.mxu0 0
      %256 = vmatpush2.bf16.msra.mxu0 0
      %257 = vmatprep.mubr.bf16.mxu0 0
      %258 = vmatmul.mubr.bf16.gmra.mxu0 %v116
      %v259 = vpop.f32.mrf.mxu0
      %v260 = vadd.f32 %v138, %v259
      %v261 = vpop.f32.mrf.mxu0
      %v262 = vadd.f32 %v142, %v261
      %v263 = vpop.f32.mrf.mxu0
      %v264 = vpop.f32.mrf.mxu0
      %265 = vdwg.mxu0
      %vm266 = vcmp.gt.f32.partialorder %v260, 0.0
      %vm267 = vcmp.gt.f32.partialorder %v262, 0.0
      %v268 = vmul.f32 %v260, 0.2
      %v269 = vmul.f32 %v262, 0.2
      %v270 = vsel %vm266, %v260, %v268
      %v271 = vsel %vm267, %v262, %v269
      %v272 = vpack.c.bf16 %v270, %v270
      %v273 = vpack.c.bf16 %v271, %v271
      %v274 = vld [vmem:[#allocation8] sm:$0xff]
      %v275 = vld [vmem:[#allocation8 + $0x8] sm:$0xff]
      %v276 = vld [vmem:[#allocation8 + $0x10] sm:$0xff]
      %v277 = vld [vmem:[#allocation8 + $0x18] sm:$0xff]
      %v278 = vld [vmem:[#allocation8 + $0x20] sm:$0xff]
      %v279 = vld [vmem:[#allocation8 + $0x28] sm:$0xff]
      %v280 = vld [vmem:[#allocation8 + $0x30] sm:$0xff]
      %v281 = vld [vmem:[#allocation8 + $0x38] sm:$0xff]
      %v282 = vld [vmem:[#allocation8 + $0x40] sm:$0xff]
      %v283 = vld [vmem:[#allocation8 + $0x48] sm:$0xff]
      %v284 = vld [vmem:[#allocation8 + $0x50] sm:$0xff]
      %v285 = vld [vmem:[#allocation8 + $0x58] sm:$0xff]
      %v286 = vld [vmem:[#allocation8 + $0x60] sm:$0xff]
      %v287 = vld [vmem:[#allocation8 + $0x68] sm:$0xff]
      %v288 = vld [vmem:[#allocation8 + $0x70] sm:$0xff]
      %v289 = vld [vmem:[#allocation8 + $0x78] sm:$0xff]
      %v290 = vld [vmem:[#allocation8 + $0x80] sm:$0xff]
      %v291 = vld [vmem:[#allocation8 + $0x88] sm:$0xff]
      %v292 = vld [vmem:[#allocation8 + $0x90] sm:$0xff]
      %v293 = vld [vmem:[#allocation8 + $0x98] sm:$0xff]
      %v294 = vld [vmem:[#allocation8 + $0xa0] sm:$0xff]
      %v295 = vld [vmem:[#allocation8 + $0xa8] sm:$0xff]
      %v296 = vld [vmem:[#allocation8 + $0xb0] sm:$0xff]
      %v297 = vld [vmem:[#allocation8 + $0xb8] sm:$0xff]
      %v298 = vld [vmem:[#allocation8 + $0xc0] sm:$0xff]
      %v299 = vld [vmem:[#allocation8 + $0xc8] sm:$0xff]
      %v300 = vld [vmem:[#allocation8 + $0xd0] sm:$0xff]
      %v301 = vld [vmem:[#allocation8 + $0xd8] sm:$0xff]
      %v302 = vld [vmem:[#allocation8 + $0xe0] sm:$0xff]
      %v303 = vld [vmem:[#allocation8 + $0xe8] sm:$0xff]
      %v304 = vld [vmem:[#allocation8 + $0xf0] sm:$0xff]
      %v305 = vld [vmem:[#allocation8 + $0xf8] sm:$0xff]
      %v306 = vld [vmem:[#allocation8 + $0x100] sm:$0xff]
      %v307 = vld [vmem:[#allocation8 + $0x108] sm:$0xff]
      %v308 = vld [vmem:[#allocation8 + $0x110] sm:$0xff]
      %v309 = vld [vmem:[#allocation8 + $0x118] sm:$0xff]
      %v310 = vld [vmem:[#allocation8 + $0x120] sm:$0xff]
      %v311 = vld [vmem:[#allocation8 + $0x128] sm:$0xff]
      %v312 = vld [vmem:[#allocation8 + $0x130] sm:$0xff]
      %v313 = vld [vmem:[#allocation8 + $0x138] sm:$0xff]
      %v314 = vld [vmem:[#allocation8 + $0x140] sm:$0xff]
      %v315 = vld [vmem:[#allocation8 + $0x148] sm:$0xff]
      %v316 = vld [vmem:[#allocation8 + $0x150] sm:$0xff]
      %v317 = vld [vmem:[#allocation8 + $0x158] sm:$0xff]
      %v318 = vld [vmem:[#allocation8 + $0x160] sm:$0xff]
      %v319 = vld [vmem:[#allocation8 + $0x168] sm:$0xff]
      %v320 = vld [vmem:[#allocation8 + $0x170] sm:$0xff]
      %v321 = vld [vmem:[#allocation8 + $0x178] sm:$0xff]
      %v322 = vld [vmem:[#allocation8 + $0x180] sm:$0xff]
      %v323 = vld [vmem:[#allocation8 + $0x188] sm:$0xff]
      %v324 = vld [vmem:[#allocation8 + $0x190] sm:$0xff]
      %v325 = vld [vmem:[#allocation8 + $0x198] sm:$0xff]
      %v326 = vld [vmem:[#allocation8 + $0x1a0] sm:$0xff]
      %v327 = vld [vmem:[#allocation8 + $0x1a8] sm:$0xff]
      %v328 = vld [vmem:[#allocation8 + $0x1b0] sm:$0xff]
      %v329 = vld [vmem:[#allocation8 + $0x1b8] sm:$0xff]
      %v330 = vld [vmem:[#allocation8 + $0x1c0] sm:$0xff]
      %v331 = vld [vmem:[#allocation8 + $0x1c8] sm:$0xff]
      %v332 = vld [vmem:[#allocation8 + $0x1d0] sm:$0xff]
      %v333 = vld [vmem:[#allocation8 + $0x1d8] sm:$0xff]
      %v334 = vld [vmem:[#allocation8 + $0x1e0] sm:$0xff]
      %v335 = vld [vmem:[#allocation8 + $0x1e8] sm:$0xff]
      %v336 = vld [vmem:[#allocation8 + $0x1f0] sm:$0xff]
      %v337 = vld [vmem:[#allocation8 + $0x1f8] sm:$0xff]
      %v338 = vld [vmem:[#allocation9] sm:$0xf]
      %v340 = vlaneseq
      %v341 = vshrl.u32 %v340, 7
      %v342 = vsub.s32 0, %v341
      %v343 = vrot.slane %v338, %v342
      %v344 = vlaneseq
      %v345 = vshrl.u32 %v344, 7
      %v346 = vsub.s32 1, %v345
      %v347 = vrot.slane %v338, %v346
      %v348 = vlaneseq
      %v349 = vshrl.u32 %v348, 7
      %v350 = vsub.s32 2, %v349
      %v351 = vrot.slane %v338, %v350
      %v352 = vlaneseq
      %v353 = vshrl.u32 %v352, 7
      %v354 = vsub.s32 3, %v353
      %v355 = vrot.slane %v338, %v354
      %v424 = vunpack.c.l.b16 %v274
      %v425 = vunpack.c.h.b16 %v274
      %v426 = vunpack.c.l.b16 %v275
      %v427 = vunpack.c.h.b16 %v275
      %v428 = vunpack.c.l.b16 %v276
      %v429 = vunpack.c.h.b16 %v276
      %v430 = vunpack.c.l.b16 %v277
      %v431 = vunpack.c.h.b16 %v277
      %v432 = vunpack.c.l.b16 %v278
      %v433 = vunpack.c.h.b16 %v278
      %v434 = vunpack.c.l.b16 %v279
      %v435 = vunpack.c.h.b16 %v279
      %v436 = vunpack.c.l.b16 %v280
      %v437 = vunpack.c.h.b16 %v280
      %v438 = vunpack.c.l.b16 %v281
      %v439 = vunpack.c.h.b16 %v281
      %v440 = vunpack.c.l.b16 %v282
      %v441 = vunpack.c.h.b16 %v282
      %v442 = vunpack.c.l.b16 %v283
      %v443 = vunpack.c.h.b16 %v283
      %v444 = vunpack.c.l.b16 %v284
      %v445 = vunpack.c.h.b16 %v284
      %v446 = vunpack.c.l.b16 %v285
      %v447 = vunpack.c.h.b16 %v285
      %v448 = vunpack.c.l.b16 %v286
      %v449 = vunpack.c.h.b16 %v286
      %v450 = vunpack.c.l.b16 %v287
      %v451 = vunpack.c.h.b16 %v287
      %v452 = vunpack.c.l.b16 %v288
      %v453 = vunpack.c.h.b16 %v288
      %v454 = vunpack.c.l.b16 %v289
      %v455 = vunpack.c.h.b16 %v289
      %v456 = vunpack.c.l.b16 %v290
      %v457 = vunpack.c.h.b16 %v290
      %v458 = vunpack.c.l.b16 %v291
      %v459 = vunpack.c.h.b16 %v291
      %v460 = vunpack.c.l.b16 %v292
      %v461 = vunpack.c.h.b16 %v292
      %v462 = vunpack.c.l.b16 %v293
      %v463 = vunpack.c.h.b16 %v293
      %v464 = vunpack.c.l.b16 %v294
      %v465 = vunpack.c.h.b16 %v294
      %v466 = vunpack.c.l.b16 %v295
      %v467 = vunpack.c.h.b16 %v295
      %v468 = vunpack.c.l.b16 %v296
      %v469 = vunpack.c.h.b16 %v296
      %v470 = vunpack.c.l.b16 %v297
      %v471 = vunpack.c.h.b16 %v297
      %v472 = vunpack.c.l.b16 %v298
      %v473 = vunpack.c.h.b16 %v298
      %v474 = vunpack.c.l.b16 %v299
      %v475 = vunpack.c.h.b16 %v299
      %v476 = vunpack.c.l.b16 %v300
      %v477 = vunpack.c.h.b16 %v300
      %v478 = vunpack.c.l.b16 %v301
      %v479 = vunpack.c.h.b16 %v301
      %v480 = vunpack.c.l.b16 %v302
      %v481 = vunpack.c.h.b16 %v302
      %v482 = vunpack.c.l.b16 %v303
      %v483 = vunpack.c.h.b16 %v303
      %v484 = vunpack.c.l.b16 %v304
      %v485 = vunpack.c.h.b16 %v304
      %v486 = vunpack.c.l.b16 %v305
      %v487 = vunpack.c.h.b16 %v305
      %v488 = vunpack.c.l.b16 %v306
      %v489 = vunpack.c.h.b16 %v306
      %v490 = vunpack.c.l.b16 %v307
      %v491 = vunpack.c.h.b16 %v307
      %v492 = vunpack.c.l.b16 %v308
      %v493 = vunpack.c.h.b16 %v308
      %v494 = vunpack.c.l.b16 %v309
      %v495 = vunpack.c.h.b16 %v309
      %v496 = vunpack.c.l.b16 %v310
      %v497 = vunpack.c.h.b16 %v310
      %v498 = vunpack.c.l.b16 %v311
      %v499 = vunpack.c.h.b16 %v311
      %v500 = vunpack.c.l.b16 %v312
      %v501 = vunpack.c.h.b16 %v312
      %v502 = vunpack.c.l.b16 %v313
      %v503 = vunpack.c.h.b16 %v313
      %v504 = vunpack.c.l.b16 %v314
      %v505 = vunpack.c.h.b16 %v314
      %v506 = vunpack.c.l.b16 %v315
      %v507 = vunpack.c.h.b16 %v315
      %v508 = vunpack.c.l.b16 %v316
      %v509 = vunpack.c.h.b16 %v316
      %v510 = vunpack.c.l.b16 %v317
      %v511 = vunpack.c.h.b16 %v317
      %v512 = vunpack.c.l.b16 %v318
      %v513 = vunpack.c.h.b16 %v318
      %v514 = vunpack.c.l.b16 %v319
      %v515 = vunpack.c.h.b16 %v319
      %v516 = vunpack.c.l.b16 %v320
      %v517 = vunpack.c.h.b16 %v320
      %v518 = vunpack.c.l.b16 %v321
      %v519 = vunpack.c.h.b16 %v321
      %v520 = vunpack.c.l.b16 %v322
      %v521 = vunpack.c.h.b16 %v322
      %v522 = vunpack.c.l.b16 %v323
      %v523 = vunpack.c.h.b16 %v323
      %v524 = vunpack.c.l.b16 %v324
      %v525 = vunpack.c.h.b16 %v324
      %v526 = vunpack.c.l.b16 %v325
      %v527 = vunpack.c.h.b16 %v325
      %v528 = vunpack.c.l.b16 %v326
      %v529 = vunpack.c.h.b16 %v326
      %v530 = vunpack.c.l.b16 %v327
      %v531 = vunpack.c.h.b16 %v327
      %v532 = vunpack.c.l.b16 %v328
      %v533 = vunpack.c.h.b16 %v328
      %v534 = vunpack.c.l.b16 %v329
      %v535 = vunpack.c.h.b16 %v329
      %v536 = vunpack.c.l.b16 %v330
      %v537 = vunpack.c.h.b16 %v330
      %v538 = vunpack.c.l.b16 %v331
      %v539 = vunpack.c.h.b16 %v331
      %v540 = vunpack.c.l.b16 %v332
      %v541 = vunpack.c.h.b16 %v332
      %v542 = vunpack.c.l.b16 %v333
      %v543 = vunpack.c.h.b16 %v333
      %v544 = vunpack.c.l.b16 %v334
      %v545 = vunpack.c.h.b16 %v334
      %v546 = vunpack.c.l.b16 %v335
      %v547 = vunpack.c.h.b16 %v335
      %v548 = vunpack.c.l.b16 %v336
      %v549 = vunpack.c.h.b16 %v336
      %v550 = vunpack.c.l.b16 %v337
      %v551 = vunpack.c.h.b16 %v337
      %v552 = vpack.c.b16 %v428, %v424
      %v553 = vpack.c.b16 %v429, %v425
      %v554 = vpack.c.b16 %v430, %v426
      %v555 = vpack.c.b16 %v431, %v427
      %v556 = vpack.c.b16 %v436, %v432
      %v557 = vpack.c.b16 %v437, %v433
      %v558 = vpack.c.b16 %v438, %v434
      %v559 = vpack.c.b16 %v439, %v435
      %v560 = vpack.c.b16 %v444, %v440
      %v561 = vpack.c.b16 %v445, %v441
      %v562 = vpack.c.b16 %v446, %v442
      %v563 = vpack.c.b16 %v447, %v443
      %v564 = vpack.c.b16 %v452, %v448
      %v565 = vpack.c.b16 %v453, %v449
      %v566 = vpack.c.b16 %v454, %v450
      %v567 = vpack.c.b16 %v455, %v451
      %v568 = vpack.c.b16 %v460, %v456
      %v569 = vpack.c.b16 %v461, %v457
      %v570 = vpack.c.b16 %v462, %v458
      %v571 = vpack.c.b16 %v463, %v459
      %v572 = vpack.c.b16 %v468, %v464
      %v573 = vpack.c.b16 %v469, %v465
      %v574 = vpack.c.b16 %v470, %v466
      %v575 = vpack.c.b16 %v471, %v467
      %v576 = vpack.c.b16 %v476, %v472
      %v577 = vpack.c.b16 %v477, %v473
      %v578 = vpack.c.b16 %v478, %v474
      %v579 = vpack.c.b16 %v479, %v475
      %v580 = vpack.c.b16 %v484, %v480
      %v581 = vpack.c.b16 %v485, %v481
      %v582 = vpack.c.b16 %v486, %v482
      %v583 = vpack.c.b16 %v487, %v483
      %v584 = vpack.c.b16 %v492, %v488
      %v585 = vpack.c.b16 %v493, %v489
      %v586 = vpack.c.b16 %v494, %v490
      %v587 = vpack.c.b16 %v495, %v491
      %v588 = vpack.c.b16 %v500, %v496
      %v589 = vpack.c.b16 %v501, %v497
      %v590 = vpack.c.b16 %v502, %v498
      %v591 = vpack.c.b16 %v503, %v499
      %v592 = vpack.c.b16 %v508, %v504
      %v593 = vpack.c.b16 %v509, %v505
      %v594 = vpack.c.b16 %v510, %v506
      %v595 = vpack.c.b16 %v511, %v507
      %v596 = vpack.c.b16 %v516, %v512
      %v597 = vpack.c.b16 %v517, %v513
      %v598 = vpack.c.b16 %v518, %v514
      %v599 = vpack.c.b16 %v519, %v515
      %v600 = vpack.c.b16 %v524, %v520
      %v601 = vpack.c.b16 %v525, %v521
      %v602 = vpack.c.b16 %v526, %v522
      %v603 = vpack.c.b16 %v527, %v523
      %v604 = vpack.c.b16 %v532, %v528
      %v605 = vpack.c.b16 %v533, %v529
      %v606 = vpack.c.b16 %v534, %v530
      %v607 = vpack.c.b16 %v535, %v531
      %v608 = vpack.c.b16 %v540, %v536
      %v609 = vpack.c.b16 %v541, %v537
      %v610 = vpack.c.b16 %v542, %v538
      %v611 = vpack.c.b16 %v543, %v539
      %v612 = vpack.c.b16 %v548, %v544
      %v613 = vpack.c.b16 %v549, %v545
      %v614 = vpack.c.b16 %v550, %v546
      %v615 = vpack.c.b16 %v551, %v547
      %680 = vmatprep.subr.bf16.mxu0 %v581
      %681 = vmatpush1.bf16.msra.mxu0 %v580
      %682 = vmatprep.subr.bf16.mxu0 %v577
      %683 = vmatpush1.bf16.msra.mxu0 %v576
      %684 = vmatprep.subr.bf16.mxu0 %v573
      %685 = vmatpush1.bf16.msra.mxu0 %v572
      %686 = vmatprep.subr.bf16.mxu0 %v569
      %687 = vmatpush1.bf16.msra.mxu0 %v568
      %688 = vmatprep.subr.bf16.mxu0 %v565
      %689 = vmatpush1.bf16.msra.mxu0 %v564
      %690 = vmatprep.subr.bf16.mxu0 %v561
      %691 = vmatpush1.bf16.msra.mxu0 %v560
      %692 = vmatprep.subr.bf16.mxu0 %v557
      %693 = vmatpush1.bf16.msra.mxu0 %v556
      %694 = vmatprep.subr.bf16.mxu0 %v553
      %695 = vmatpush1.bf16.msra.mxu0 %v552
      %696 = vmatprep.subr.bf16.mxu0 %v613
      %697 = vmatpush2.bf16.msra.mxu0 %v612
      %698 = vmatprep.subr.bf16.mxu0 %v609
      %699 = vmatpush2.bf16.msra.mxu0 %v608
      %700 = vmatprep.subr.bf16.mxu0 %v605
      %701 = vmatpush2.bf16.msra.mxu0 %v604
      %702 = vmatprep.subr.bf16.mxu0 %v601
      %703 = vmatpush2.bf16.msra.mxu0 %v600
      %704 = vmatprep.subr.bf16.mxu0 %v597
      %705 = vmatpush2.bf16.msra.mxu0 %v596
      %706 = vmatprep.subr.bf16.mxu0 %v593
      %707 = vmatpush2.bf16.msra.mxu0 %v592
      %708 = vmatprep.subr.bf16.mxu0 %v589
      %709 = vmatpush2.bf16.msra.mxu0 %v588
      %710 = vmatprep.subr.bf16.mxu0 %v585
      %711 = vmatpush2.bf16.msra.mxu0 %v584
      %712 = vmatprep.mubr.bf16.mxu0 %v273
      %713 = vmatmul.mubr.bf16.gmra.mxu0 %v272
      %v714 = vpop.f32.mrf.mxu0
      %v715 = vadd.f32 %v343, %v714
      %v716 = vpop.f32.mrf.mxu0
      %v717 = vadd.f32 %v347, %v716
      %v718 = vpop.f32.mrf.mxu0
      %v719 = vpop.f32.mrf.mxu0
      %720 = vdwg.mxu0
      %721 = vmatprep.subr.bf16.mxu0 %v583
      %722 = vmatpush1.bf16.msra.mxu0 %v582
      %723 = vmatprep.subr.bf16.mxu0 %v579
      %724 = vmatpush1.bf16.msra.mxu0 %v578
      %725 = vmatprep.subr.bf16.mxu0 %v575
      %726 = vmatpush1.bf16.msra.mxu0 %v574
      %727 = vmatprep.subr.bf16.mxu0 %v571
      %728 = vmatpush1.bf16.msra.mxu0 %v570
      %729 = vmatprep.subr.bf16.mxu0 %v567
      %730 = vmatpush1.bf16.msra.mxu0 %v566
      %731 = vmatprep.subr.bf16.mxu0 %v563
      %732 = vmatpush1.bf16.msra.mxu0 %v562
      %733 = vmatprep.subr.bf16.mxu0 %v559
      %734 = vmatpush1.bf16.msra.mxu0 %v558
      %735 = vmatprep.subr.bf16.mxu0 %v555
      %736 = vmatpush1.bf16.msra.mxu0 %v554
      %737 = vmatprep.subr.bf16.mxu0 %v615
      %738 = vmatpush2.bf16.msra.mxu0 %v614
      %739 = vmatprep.subr.bf16.mxu0 %v611
      %740 = vmatpush2.bf16.msra.mxu0 %v610
      %741 = vmatprep.subr.bf16.mxu0 %v607
      %742 = vmatpush2.bf16.msra.mxu0 %v606
      %743 = vmatprep.subr.bf16.mxu0 %v603
      %744 = vmatpush2.bf16.msra.mxu0 %v602
      %745 = vmatprep.subr.bf16.mxu0 %v599
      %746 = vmatpush2.bf16.msra.mxu0 %v598
      %747 = vmatprep.subr.bf16.mxu0 %v595
      %748 = vmatpush2.bf16.msra.mxu0 %v594
      %749 = vmatprep.subr.bf16.mxu0 %v591
      %750 = vmatpush2.bf16.msra.mxu0 %v590
      %751 = vmatprep.subr.bf16.mxu0 %v587
      %752 = vmatpush2.bf16.msra.mxu0 %v586
      %753 = vmatprep.mubr.bf16.mxu0 %v273
      %754 = vmatmul.mubr.bf16.gmra.mxu0 %v272
      %v755 = vpop.f32.mrf.mxu0
      %v756 = vadd.f32 %v351, %v755
      %v757 = vpop.f32.mrf.mxu0
      %v758 = vadd.f32 %v355, %v757
      %v759 = vpop.f32.mrf.mxu0
      %v760 = vpop.f32.mrf.mxu0
      %761 = vdwg.mxu0
      %vm762 = vcmp.gt.f32.partialorder %v715, 0.0
      %vm763 = vcmp.gt.f32.partialorder %v717, 0.0
      %vm764 = vcmp.gt.f32.partialorder %v756, 0.0
      %vm765 = vcmp.gt.f32.partialorder %v758, 0.0
      %v766 = vmul.f32 %v715, 0.2
      %v767 = vmul.f32 %v717, 0.2
      %v768 = vmul.f32 %v756, 0.2
      %v769 = vmul.f32 %v758, 0.2
      %v770 = vsel %vm762, %v715, %v766
      %v771 = vsel %vm763, %v717, %v767
      %v772 = vsel %vm764, %v756, %v768
      %v773 = vsel %vm765, %v758, %v769
      %v774 = vpack.c.bf16 %v770, %v770
      %v775 = vpack.c.bf16 %v771, %v771
      %v776 = vpack.c.bf16 %v772, %v772
      %v777 = vpack.c.bf16 %v773, %v773
      %v778 = vld [vmem:[#allocation11] sm:$0xff]
      %v779 = vld [vmem:[#allocation11 + $0x8] sm:$0xff]
      %v780 = vld [vmem:[#allocation11 + $0x10] sm:$0xff]
      %v781 = vld [vmem:[#allocation11 + $0x18] sm:$0xff]
      %v782 = vld [vmem:[#allocation11 + $0x20] sm:$0xff]
      %v783 = vld [vmem:[#allocation11 + $0x28] sm:$0xff]
      %v784 = vld [vmem:[#allocation11 + $0x30] sm:$0xff]
      %v785 = vld [vmem:[#allocation11 + $0x38] sm:$0xff]
      %v786 = vld [vmem:[#allocation11 + $0x40] sm:$0xff]
      %v787 = vld [vmem:[#allocation11 + $0x48] sm:$0xff]
      %v788 = vld [vmem:[#allocation11 + $0x50] sm:$0xff]
      %v789 = vld [vmem:[#allocation11 + $0x58] sm:$0xff]
      %v790 = vld [vmem:[#allocation11 + $0x60] sm:$0xff]
      %v791 = vld [vmem:[#allocation11 + $0x68] sm:$0xff]
      %v792 = vld [vmem:[#allocation11 + $0x70] sm:$0xff]
      %v793 = vld [vmem:[#allocation11 + $0x78] sm:$0xff]
      %v794 = vld [vmem:[#allocation11 + $0x80] sm:$0xff]
      %v795 = vld [vmem:[#allocation11 + $0x88] sm:$0xff]
      %v796 = vld [vmem:[#allocation11 + $0x90] sm:$0xff]
      %v797 = vld [vmem:[#allocation11 + $0x98] sm:$0xff]
      %v798 = vld [vmem:[#allocation11 + $0xa0] sm:$0xff]
      %v799 = vld [vmem:[#allocation11 + $0xa8] sm:$0xff]
      %v800 = vld [vmem:[#allocation11 + $0xb0] sm:$0xff]
      %v801 = vld [vmem:[#allocation11 + $0xb8] sm:$0xff]
      %v802 = vld [vmem:[#allocation11 + $0xc0] sm:$0xff]
      %v803 = vld [vmem:[#allocation11 + $0xc8] sm:$0xff]
      %v804 = vld [vmem:[#allocation11 + $0xd0] sm:$0xff]
      %v805 = vld [vmem:[#allocation11 + $0xd8] sm:$0xff]
      %v806 = vld [vmem:[#allocation11 + $0xe0] sm:$0xff]
      %v807 = vld [vmem:[#allocation11 + $0xe8] sm:$0xff]
      %v808 = vld [vmem:[#allocation11 + $0xf0] sm:$0xff]
      %v809 = vld [vmem:[#allocation11 + $0xf8] sm:$0xff]
      %v810 = vld [vmem:[#allocation11 + $0x100] sm:$0xff]
      %v811 = vld [vmem:[#allocation11 + $0x108] sm:$0xff]
      %v812 = vld [vmem:[#allocation11 + $0x110] sm:$0xff]
      %v813 = vld [vmem:[#allocation11 + $0x118] sm:$0xff]
      %v814 = vld [vmem:[#allocation11 + $0x120] sm:$0xff]
      %v815 = vld [vmem:[#allocation11 + $0x128] sm:$0xff]
      %v816 = vld [vmem:[#allocation11 + $0x130] sm:$0xff]
      %v817 = vld [vmem:[#allocation11 + $0x138] sm:$0xff]
      %v818 = vld [vmem:[#allocation11 + $0x140] sm:$0xff]
      %v819 = vld [vmem:[#allocation11 + $0x148] sm:$0xff]
      %v820 = vld [vmem:[#allocation11 + $0x150] sm:$0xff]
      %v821 = vld [vmem:[#allocation11 + $0x158] sm:$0xff]
      %v822 = vld [vmem:[#allocation11 + $0x160] sm:$0xff]
      %v823 = vld [vmem:[#allocation11 + $0x168] sm:$0xff]
      %v824 = vld [vmem:[#allocation11 + $0x170] sm:$0xff]
      %v825 = vld [vmem:[#allocation11 + $0x178] sm:$0xff]
      %v826 = vld [vmem:[#allocation11 + $0x180] sm:$0xff]
      %v827 = vld [vmem:[#allocation11 + $0x188] sm:$0xff]
      %v828 = vld [vmem:[#allocation11 + $0x190] sm:$0xff]
      %v829 = vld [vmem:[#allocation11 + $0x198] sm:$0xff]
      %v830 = vld [vmem:[#allocation11 + $0x1a0] sm:$0xff]
      %v831 = vld [vmem:[#allocation11 + $0x1a8] sm:$0xff]
      %v832 = vld [vmem:[#allocation11 + $0x1b0] sm:$0xff]
      %v833 = vld [vmem:[#allocation11 + $0x1b8] sm:$0xff]
      %v834 = vld [vmem:[#allocation11 + $0x1c0] sm:$0xff]
      %v835 = vld [vmem:[#allocation11 + $0x1c8] sm:$0xff]
      %v836 = vld [vmem:[#allocation11 + $0x1d0] sm:$0xff]
      %v837 = vld [vmem:[#allocation11 + $0x1d8] sm:$0xff]
      %v838 = vld [vmem:[#allocation11 + $0x1e0] sm:$0xff]
      %v839 = vld [vmem:[#allocation11 + $0x1e8] sm:$0xff]
      %v840 = vld [vmem:[#allocation11 + $0x1f0] sm:$0xff]
      %v841 = vld [vmem:[#allocation11 + $0x1f8] sm:$0xff]
      %v842 = vld [vmem:[#allocation11 + $0x200] sm:$0xff]
      %v843 = vld [vmem:[#allocation11 + $0x208] sm:$0xff]
      %v844 = vld [vmem:[#allocation11 + $0x210] sm:$0xff]
      %v845 = vld [vmem:[#allocation11 + $0x218] sm:$0xff]
      %v846 = vld [vmem:[#allocation11 + $0x220] sm:$0xff]
      %v847 = vld [vmem:[#allocation11 + $0x228] sm:$0xff]
      %v848 = vld [vmem:[#allocation11 + $0x230] sm:$0xff]
      %v849 = vld [vmem:[#allocation11 + $0x238] sm:$0xff]
      %v850 = vld [vmem:[#allocation11 + $0x240] sm:$0xff]
      %v851 = vld [vmem:[#allocation11 + $0x248] sm:$0xff]
      %v852 = vld [vmem:[#allocation11 + $0x250] sm:$0xff]
      %v853 = vld [vmem:[#allocation11 + $0x258] sm:$0xff]
      %v854 = vld [vmem:[#allocation11 + $0x260] sm:$0xff]
      %v855 = vld [vmem:[#allocation11 + $0x268] sm:$0xff]
      %v856 = vld [vmem:[#allocation11 + $0x270] sm:$0xff]
      %v857 = vld [vmem:[#allocation11 + $0x278] sm:$0xff]
      %v858 = vld [vmem:[#allocation11 + $0x280] sm:$0xff]
      %v859 = vld [vmem:[#allocation11 + $0x288] sm:$0xff]
      %v860 = vld [vmem:[#allocation11 + $0x290] sm:$0xff]
      %v861 = vld [vmem:[#allocation11 + $0x298] sm:$0xff]
      %v862 = vld [vmem:[#allocation11 + $0x2a0] sm:$0xff]
      %v863 = vld [vmem:[#allocation11 + $0x2a8] sm:$0xff]
      %v864 = vld [vmem:[#allocation11 + $0x2b0] sm:$0xff]
      %v865 = vld [vmem:[#allocation11 + $0x2b8] sm:$0xff]
      %v866 = vld [vmem:[#allocation11 + $0x2c0] sm:$0xff]
      %v867 = vld [vmem:[#allocation11 + $0x2c8] sm:$0xff]
      %v868 = vld [vmem:[#allocation11 + $0x2d0] sm:$0xff]
      %v869 = vld [vmem:[#allocation11 + $0x2d8] sm:$0xff]
      %v870 = vld [vmem:[#allocation11 + $0x2e0] sm:$0xff]
      %v871 = vld [vmem:[#allocation11 + $0x2e8] sm:$0xff]
      %v872 = vld [vmem:[#allocation11 + $0x2f0] sm:$0xff]
      %v873 = vld [vmem:[#allocation11 + $0x2f8] sm:$0xff]
      %v874 = vld [vmem:[#allocation11 + $0x300] sm:$0xff]
      %v875 = vld [vmem:[#allocation11 + $0x308] sm:$0xff]
      %v876 = vld [vmem:[#allocation11 + $0x310] sm:$0xff]
      %v877 = vld [vmem:[#allocation11 + $0x318] sm:$0xff]
      %v878 = vld [vmem:[#allocation11 + $0x320] sm:$0xff]
      %v879 = vld [vmem:[#allocation11 + $0x328] sm:$0xff]
      %v880 = vld [vmem:[#allocation11 + $0x330] sm:$0xff]
      %v881 = vld [vmem:[#allocation11 + $0x338] sm:$0xff]
      %v882 = vld [vmem:[#allocation11 + $0x340] sm:$0xff]
      %v883 = vld [vmem:[#allocation11 + $0x348] sm:$0xff]
      %v884 = vld [vmem:[#allocation11 + $0x350] sm:$0xff]
      %v885 = vld [vmem:[#allocation11 + $0x358] sm:$0xff]
      %v886 = vld [vmem:[#allocation11 + $0x360] sm:$0xff]
      %v887 = vld [vmem:[#allocation11 + $0x368] sm:$0xff]
      %v888 = vld [vmem:[#allocation11 + $0x370] sm:$0xff]
      %v889 = vld [vmem:[#allocation11 + $0x378] sm:$0xff]
      %v890 = vld [vmem:[#allocation11 + $0x380] sm:$0xff]
      %v891 = vld [vmem:[#allocation11 + $0x388] sm:$0xff]
      %v892 = vld [vmem:[#allocation11 + $0x390] sm:$0xff]
      %v893 = vld [vmem:[#allocation11 + $0x398] sm:$0xff]
      %v894 = vld [vmem:[#allocation11 + $0x3a0] sm:$0xff]
      %v895 = vld [vmem:[#allocation11 + $0x3a8] sm:$0xff]
      %v896 = vld [vmem:[#allocation11 + $0x3b0] sm:$0xff]
      %v897 = vld [vmem:[#allocation11 + $0x3b8] sm:$0xff]
      %v898 = vld [vmem:[#allocation11 + $0x3c0] sm:$0xff]
      %v899 = vld [vmem:[#allocation11 + $0x3c8] sm:$0xff]
      %v900 = vld [vmem:[#allocation11 + $0x3d0] sm:$0xff]
      %v901 = vld [vmem:[#allocation11 + $0x3d8] sm:$0xff]
      %v902 = vld [vmem:[#allocation11 + $0x3e0] sm:$0xff]
      %v903 = vld [vmem:[#allocation11 + $0x3e8] sm:$0xff]
      %v904 = vld [vmem:[#allocation11 + $0x3f0] sm:$0xff]
      %v905 = vld [vmem:[#allocation11 + $0x3f8] sm:$0xff]
      %v906 = vld [vmem:[#allocation11 + $0x400] sm:$0xff]
      %v907 = vld [vmem:[#allocation11 + $0x408] sm:$0xff]
      %v908 = vld [vmem:[#allocation11 + $0x410] sm:$0xff]
      %v909 = vld [vmem:[#allocation11 + $0x418] sm:$0xff]
      %v910 = vld [vmem:[#allocation11 + $0x420] sm:$0xff]
      %v911 = vld [vmem:[#allocation11 + $0x428] sm:$0xff]
      %v912 = vld [vmem:[#allocation11 + $0x430] sm:$0xff]
      %v913 = vld [vmem:[#allocation11 + $0x438] sm:$0xff]
      %v914 = vld [vmem:[#allocation11 + $0x440] sm:$0xff]
      %v915 = vld [vmem:[#allocation11 + $0x448] sm:$0xff]
      %v916 = vld [vmem:[#allocation11 + $0x450] sm:$0xff]
      %v917 = vld [vmem:[#allocation11 + $0x458] sm:$0xff]
      %v918 = vld [vmem:[#allocation11 + $0x460] sm:$0xff]
      %v919 = vld [vmem:[#allocation11 + $0x468] sm:$0xff]
      %v920 = vld [vmem:[#allocation11 + $0x470] sm:$0xff]
      %v921 = vld [vmem:[#allocation11 + $0x478] sm:$0xff]
      %v922 = vld [vmem:[#allocation11 + $0x480] sm:$0xff]
      %v923 = vld [vmem:[#allocation11 + $0x488] sm:$0xff]
      %v924 = vld [vmem:[#allocation11 + $0x490] sm:$0xff]
      %v925 = vld [vmem:[#allocation11 + $0x498] sm:$0xff]
      %v926 = vld [vmem:[#allocation11 + $0x4a0] sm:$0xff]
      %v927 = vld [vmem:[#allocation11 + $0x4a8] sm:$0xff]
      %v928 = vld [vmem:[#allocation11 + $0x4b0] sm:$0xff]
      %v929 = vld [vmem:[#allocation11 + $0x4b8] sm:$0xff]
      %v930 = vld [vmem:[#allocation11 + $0x4c0] sm:$0xff]
      %v931 = vld [vmem:[#allocation11 + $0x4c8] sm:$0xff]
      %v932 = vld [vmem:[#allocation11 + $0x4d0] sm:$0xff]
      %v933 = vld [vmem:[#allocation11 + $0x4d8] sm:$0xff]
      %v934 = vld [vmem:[#allocation11 + $0x4e0] sm:$0xff]
      %v935 = vld [vmem:[#allocation11 + $0x4e8] sm:$0xff]
      %v936 = vld [vmem:[#allocation11 + $0x4f0] sm:$0xff]
      %v937 = vld [vmem:[#allocation11 + $0x4f8] sm:$0xff]
      %v938 = vld [vmem:[#allocation11 + $0x500] sm:$0xff]
      %v939 = vld [vmem:[#allocation11 + $0x508] sm:$0xff]
      %v940 = vld [vmem:[#allocation11 + $0x510] sm:$0xff]
      %v941 = vld [vmem:[#allocation11 + $0x518] sm:$0xff]
      %v942 = vld [vmem:[#allocation11 + $0x520] sm:$0xff]
      %v943 = vld [vmem:[#allocation11 + $0x528] sm:$0xff]
      %v944 = vld [vmem:[#allocation11 + $0x530] sm:$0xff]
      %v945 = vld [vmem:[#allocation11 + $0x538] sm:$0xff]
      %v946 = vld [vmem:[#allocation11 + $0x540] sm:$0xff]
      %v947 = vld [vmem:[#allocation11 + $0x548] sm:$0xff]
      %v948 = vld [vmem:[#allocation11 + $0x550] sm:$0xff]
      %v949 = vld [vmem:[#allocation11 + $0x558] sm:$0xff]
      %v950 = vld [vmem:[#allocation11 + $0x560] sm:$0xff]
      %v951 = vld [vmem:[#allocation11 + $0x568] sm:$0xff]
      %v952 = vld [vmem:[#allocation11 + $0x570] sm:$0xff]
      %v953 = vld [vmem:[#allocation11 + $0x578] sm:$0xff]
      %v954 = vld [vmem:[#allocation11 + $0x580] sm:$0xff]
      %v955 = vld [vmem:[#allocation11 + $0x588] sm:$0xff]
      %v956 = vld [vmem:[#allocation11 + $0x590] sm:$0xff]
      %v957 = vld [vmem:[#allocation11 + $0x598] sm:$0xff]
      %v958 = vld [vmem:[#allocation11 + $0x5a0] sm:$0xff]
      %v959 = vld [vmem:[#allocation11 + $0x5a8] sm:$0xff]
      %v960 = vld [vmem:[#allocation11 + $0x5b0] sm:$0xff]
      %v961 = vld [vmem:[#allocation11 + $0x5b8] sm:$0xff]
      %v962 = vld [vmem:[#allocation11 + $0x5c0] sm:$0xff]
      %v963 = vld [vmem:[#allocation11 + $0x5c8] sm:$0xff]
      %v964 = vld [vmem:[#allocation11 + $0x5d0] sm:$0xff]
      %v965 = vld [vmem:[#allocation11 + $0x5d8] sm:$0xff]
      %v966 = vld [vmem:[#allocation11 + $0x5e0] sm:$0xff]
      %v967 = vld [vmem:[#allocation11 + $0x5e8] sm:$0xff]
      %v968 = vld [vmem:[#allocation11 + $0x5f0] sm:$0xff]
      %v969 = vld [vmem:[#allocation11 + $0x5f8] sm:$0xff]
      %v970 = vld [vmem:[#allocation11 + $0x600] sm:$0xff]
      %v971 = vld [vmem:[#allocation11 + $0x608] sm:$0xff]
      %v972 = vld [vmem:[#allocation11 + $0x610] sm:$0xff]
      %v973 = vld [vmem:[#allocation11 + $0x618] sm:$0xff]
      %v974 = vld [vmem:[#allocation11 + $0x620] sm:$0xff]
      %v975 = vld [vmem:[#allocation11 + $0x628] sm:$0xff]
      %v976 = vld [vmem:[#allocation11 + $0x630] sm:$0xff]
      %v977 = vld [vmem:[#allocation11 + $0x638] sm:$0xff]
      %v978 = vld [vmem:[#allocation11 + $0x640] sm:$0xff]
      %v979 = vld [vmem:[#allocation11 + $0x648] sm:$0xff]
      %v980 = vld [vmem:[#allocation11 + $0x650] sm:$0xff]
      %v981 = vld [vmem:[#allocation11 + $0x658] sm:$0xff]
      %v982 = vld [vmem:[#allocation11 + $0x660] sm:$0xff]
      %v983 = vld [vmem:[#allocation11 + $0x668] sm:$0xff]
      %v984 = vld [vmem:[#allocation11 + $0x670] sm:$0xff]
      %v985 = vld [vmem:[#allocation11 + $0x678] sm:$0xff]
      %v986 = vld [vmem:[#allocation11 + $0x680] sm:$0xff]
      %v987 = vld [vmem:[#allocation11 + $0x688] sm:$0xff]
      %v988 = vld [vmem:[#allocation11 + $0x690] sm:$0xff]
      %v989 = vld [vmem:[#allocation11 + $0x698] sm:$0xff]
      %v990 = vld [vmem:[#allocation11 + $0x6a0] sm:$0xff]
      %v991 = vld [vmem:[#allocation11 + $0x6a8] sm:$0xff]
      %v992 = vld [vmem:[#allocation11 + $0x6b0] sm:$0xff]
      %v993 = vld [vmem:[#allocation11 + $0x6b8] sm:$0xff]
      %v994 = vld [vmem:[#allocation11 + $0x6c0] sm:$0xff]
      %v995 = vld [vmem:[#allocation11 + $0x6c8] sm:$0xff]
      %v996 = vld [vmem:[#allocation11 + $0x6d0] sm:$0xff]
      %v997 = vld [vmem:[#allocation11 + $0x6d8] sm:$0xff]
      %v998 = vld [vmem:[#allocation11 + $0x6e0] sm:$0xff]
      %v999 = vld [vmem:[#allocation11 + $0x6e8] sm:$0xff]
      %v1000 = vld [vmem:[#allocation11 + $0x6f0] sm:$0xff]
      %v1001 = vld [vmem:[#allocation11 + $0x6f8] sm:$0xff]
      %v1002 = vld [vmem:[#allocation11 + $0x700] sm:$0xff]
      %v1003 = vld [vmem:[#allocation11 + $0x708] sm:$0xff]
      %v1004 = vld [vmem:[#allocation11 + $0x710] sm:$0xff]
      %v1005 = vld [vmem:[#allocation11 + $0x718] sm:$0xff]
      %v1006 = vld [vmem:[#allocation11 + $0x720] sm:$0xff]
      %v1007 = vld [vmem:[#allocation11 + $0x728] sm:$0xff]
      %v1008 = vld [vmem:[#allocation11 + $0x730] sm:$0xff]
      %v1009 = vld [vmem:[#allocation11 + $0x738] sm:$0xff]
      %v1010 = vld [vmem:[#allocation11 + $0x740] sm:$0xff]
      %v1011 = vld [vmem:[#allocation11 + $0x748] sm:$0xff]
      %v1012 = vld [vmem:[#allocation11 + $0x750] sm:$0xff]
      %v1013 = vld [vmem:[#allocation11 + $0x758] sm:$0xff]
      %v1014 = vld [vmem:[#allocation11 + $0x760] sm:$0xff]
      %v1015 = vld [vmem:[#allocation11 + $0x768] sm:$0xff]
      %v1016 = vld [vmem:[#allocation11 + $0x770] sm:$0xff]
      %v1017 = vld [vmem:[#allocation11 + $0x778] sm:$0xff]
      %v1018 = vld [vmem:[#allocation11 + $0x780] sm:$0xff]
      %v1019 = vld [vmem:[#allocation11 + $0x788] sm:$0xff]
      %v1020 = vld [vmem:[#allocation11 + $0x790] sm:$0xff]
      %v1021 = vld [vmem:[#allocation11 + $0x798] sm:$0xff]
      %v1022 = vld [vmem:[#allocation11 + $0x7a0] sm:$0xff]
      %v1023 = vld [vmem:[#allocation11 + $0x7a8] sm:$0xff]
      %v1024 = vld [vmem:[#allocation11 + $0x7b0] sm:$0xff]
      %v1025 = vld [vmem:[#allocation11 + $0x7b8] sm:$0xff]
      %v1026 = vld [vmem:[#allocation11 + $0x7c0] sm:$0xff]
      %v1027 = vld [vmem:[#allocation11 + $0x7c8] sm:$0xff]
      %v1028 = vld [vmem:[#allocation11 + $0x7d0] sm:$0xff]
      %v1029 = vld [vmem:[#allocation11 + $0x7d8] sm:$0xff]
      %v1030 = vld [vmem:[#allocation11 + $0x7e0] sm:$0xff]
      %v1031 = vld [vmem:[#allocation11 + $0x7e8] sm:$0xff]
      %v1032 = vld [vmem:[#allocation11 + $0x7f0] sm:$0xff]
      %v1033 = vld [vmem:[#allocation11 + $0x7f8] sm:$0xff]
      %v1034 = vld [vmem:[%s6] sm:$0xff]
      %v1036 = vlaneseq
      %v1037 = vshrl.u32 %v1036, 7
      %v1038 = vsub.s32 0, %v1037
      %v1039 = vrot.slane %v1034, %v1038
      %v1040 = vlaneseq
      %v1041 = vshrl.u32 %v1040, 7
      %v1042 = vsub.s32 1, %v1041
      %v1043 = vrot.slane %v1034, %v1042
      %v1044 = vlaneseq
      %v1045 = vshrl.u32 %v1044, 7
      %v1046 = vsub.s32 2, %v1045
      %v1047 = vrot.slane %v1034, %v1046
      %v1048 = vlaneseq
      %v1049 = vshrl.u32 %v1048, 7
      %v1050 = vsub.s32 3, %v1049
      %v1051 = vrot.slane %v1034, %v1050
      %v1052 = vlaneseq
      %v1053 = vshrl.u32 %v1052, 7
      %v1054 = vsub.s32 4, %v1053
      %v1055 = vrot.slane %v1034, %v1054
      %v1056 = vlaneseq
      %v1057 = vshrl.u32 %v1056, 7
      %v1058 = vsub.s32 5, %v1057
      %v1059 = vrot.slane %v1034, %v1058
      %v1060 = vlaneseq
      %v1061 = vshrl.u32 %v1060, 7
      %v1062 = vsub.s32 6, %v1061
      %v1063 = vrot.slane %v1034, %v1062
      %v1064 = vlaneseq
      %v1065 = vshrl.u32 %v1064, 7
      %v1066 = vsub.s32 7, %v1065
      %v1067 = vrot.slane %v1034, %v1066
      %v1332 = vunpack.c.l.b16 %v778
      %v1333 = vunpack.c.h.b16 %v778
      %v1334 = vunpack.c.l.b16 %v779
      %v1335 = vunpack.c.h.b16 %v779
      %v1336 = vunpack.c.l.b16 %v780
      %v1337 = vunpack.c.h.b16 %v780
      %v1338 = vunpack.c.l.b16 %v781
      %v1339 = vunpack.c.h.b16 %v781
      %v1340 = vunpack.c.l.b16 %v782
      %v1341 = vunpack.c.h.b16 %v782
      %v1342 = vunpack.c.l.b16 %v783
      %v1343 = vunpack.c.h.b16 %v783
      %v1344 = vunpack.c.l.b16 %v784
      %v1345 = vunpack.c.h.b16 %v784
      %v1346 = vunpack.c.l.b16 %v785
      %v1347 = vunpack.c.h.b16 %v785
      %v1348 = vunpack.c.l.b16 %v786
      %v1349 = vunpack.c.h.b16 %v786
      %v1350 = vunpack.c.l.b16 %v787
      %v1351 = vunpack.c.h.b16 %v787
      %v1352 = vunpack.c.l.b16 %v788
      %v1353 = vunpack.c.h.b16 %v788
      %v1354 = vunpack.c.l.b16 %v789
      %v1355 = vunpack.c.h.b16 %v789
      %v1356 = vunpack.c.l.b16 %v790
      %v1357 = vunpack.c.h.b16 %v790
      %v1358 = vunpack.c.l.b16 %v791
      %v1359 = vunpack.c.h.b16 %v791
      %v1360 = vunpack.c.l.b16 %v792
      %v1361 = vunpack.c.h.b16 %v792
      %v1362 = vunpack.c.l.b16 %v793
      %v1363 = vunpack.c.h.b16 %v793
      %v1364 = vunpack.c.l.b16 %v794
      %v1365 = vunpack.c.h.b16 %v794
      %v1366 = vunpack.c.l.b16 %v795
      %v1367 = vunpack.c.h.b16 %v795
      %v1368 = vunpack.c.l.b16 %v796
      %v1369 = vunpack.c.h.b16 %v796
      %v1370 = vunpack.c.l.b16 %v797
      %v1371 = vunpack.c.h.b16 %v797
      %v1372 = vunpack.c.l.b16 %v798
      %v1373 = vunpack.c.h.b16 %v798
      %v1374 = vunpack.c.l.b16 %v799
      %v1375 = vunpack.c.h.b16 %v799
      %v1376 = vunpack.c.l.b16 %v800
      %v1377 = vunpack.c.h.b16 %v800
      %v1378 = vunpack.c.l.b16 %v801
      %v1379 = vunpack.c.h.b16 %v801
      %v1380 = vunpack.c.l.b16 %v802
      %v1381 = vunpack.c.h.b16 %v802
      %v1382 = vunpack.c.l.b16 %v803
      %v1383 = vunpack.c.h.b16 %v803
      %v1384 = vunpack.c.l.b16 %v804
      %v1385 = vunpack.c.h.b16 %v804
      %v1386 = vunpack.c.l.b16 %v805
      %v1387 = vunpack.c.h.b16 %v805
      %v1388 = vunpack.c.l.b16 %v806
      %v1389 = vunpack.c.h.b16 %v806
      %v1390 = vunpack.c.l.b16 %v807
      %v1391 = vunpack.c.h.b16 %v807
      %v1392 = vunpack.c.l.b16 %v808
      %v1393 = vunpack.c.h.b16 %v808
      %v1394 = vunpack.c.l.b16 %v809
      %v1395 = vunpack.c.h.b16 %v809
      %v1396 = vunpack.c.l.b16 %v810
      %v1397 = vunpack.c.h.b16 %v810
      %v1398 = vunpack.c.l.b16 %v811
      %v1399 = vunpack.c.h.b16 %v811
      %v1400 = vunpack.c.l.b16 %v812
      %v1401 = vunpack.c.h.b16 %v812
      %v1402 = vunpack.c.l.b16 %v813
      %v1403 = vunpack.c.h.b16 %v813
      %v1404 = vunpack.c.l.b16 %v814
      %v1405 = vunpack.c.h.b16 %v814
      %v1406 = vunpack.c.l.b16 %v815
      %v1407 = vunpack.c.h.b16 %v815
      %v1408 = vunpack.c.l.b16 %v816
      %v1409 = vunpack.c.h.b16 %v816
      %v1410 = vunpack.c.l.b16 %v817
      %v1411 = vunpack.c.h.b16 %v817
      %v1412 = vunpack.c.l.b16 %v818
      %v1413 = vunpack.c.h.b16 %v818
      %v1414 = vunpack.c.l.b16 %v819
      %v1415 = vunpack.c.h.b16 %v819
      %v1416 = vunpack.c.l.b16 %v820
      %v1417 = vunpack.c.h.b16 %v820
      %v1418 = vunpack.c.l.b16 %v821
      %v1419 = vunpack.c.h.b16 %v821
      %v1420 = vunpack.c.l.b16 %v822
      %v1421 = vunpack.c.h.b16 %v822
      %v1422 = vunpack.c.l.b16 %v823
      %v1423 = vunpack.c.h.b16 %v823
      %v1424 = vunpack.c.l.b16 %v824
      %v1425 = vunpack.c.h.b16 %v824
      %v1426 = vunpack.c.l.b16 %v825
      %v1427 = vunpack.c.h.b16 %v825
      %v1428 = vunpack.c.l.b16 %v826
      %v1429 = vunpack.c.h.b16 %v826
      %v1430 = vunpack.c.l.b16 %v827
      %v1431 = vunpack.c.h.b16 %v827
      %v1432 = vunpack.c.l.b16 %v828
      %v1433 = vunpack.c.h.b16 %v828
      %v1434 = vunpack.c.l.b16 %v829
      %v1435 = vunpack.c.h.b16 %v829
      %v1436 = vunpack.c.l.b16 %v830
      %v1437 = vunpack.c.h.b16 %v830
      %v1438 = vunpack.c.l.b16 %v831
      %v1439 = vunpack.c.h.b16 %v831
      %v1440 = vunpack.c.l.b16 %v832
      %v1441 = vunpack.c.h.b16 %v832
      %v1442 = vunpack.c.l.b16 %v833
      %v1443 = vunpack.c.h.b16 %v833
      %v1444 = vunpack.c.l.b16 %v834
      %v1445 = vunpack.c.h.b16 %v834
      %v1446 = vunpack.c.l.b16 %v835
      %v1447 = vunpack.c.h.b16 %v835
      %v1448 = vunpack.c.l.b16 %v836
      %v1449 = vunpack.c.h.b16 %v836
      %v1450 = vunpack.c.l.b16 %v837
      %v1451 = vunpack.c.h.b16 %v837
      %v1452 = vunpack.c.l.b16 %v838
      %v1453 = vunpack.c.h.b16 %v838
      %v1454 = vunpack.c.l.b16 %v839
      %v1455 = vunpack.c.h.b16 %v839
      %v1456 = vunpack.c.l.b16 %v840
      %v1457 = vunpack.c.h.b16 %v840
      %v1458 = vunpack.c.l.b16 %v841
      %v1459 = vunpack.c.h.b16 %v841
      %v1460 = vunpack.c.l.b16 %v842
      %v1461 = vunpack.c.h.b16 %v842
      %v1462 = vunpack.c.l.b16 %v843
      %v1463 = vunpack.c.h.b16 %v843
      %v1464 = vunpack.c.l.b16 %v844
      %v1465 = vunpack.c.h.b16 %v844
      %v1466 = vunpack.c.l.b16 %v845
      %v1467 = vunpack.c.h.b16 %v845
      %v1468 = vunpack.c.l.b16 %v846
      %v1469 = vunpack.c.h.b16 %v846
      %v1470 = vunpack.c.l.b16 %v847
      %v1471 = vunpack.c.h.b16 %v847
      %v1472 = vunpack.c.l.b16 %v848
      %v1473 = vunpack.c.h.b16 %v848
      %v1474 = vunpack.c.l.b16 %v849
      %v1475 = vunpack.c.h.b16 %v849
      %v1476 = vunpack.c.l.b16 %v850
      %v1477 = vunpack.c.h.b16 %v850
      %v1478 = vunpack.c.l.b16 %v851
      %v1479 = vunpack.c.h.b16 %v851
      %v1480 = vunpack.c.l.b16 %v852
      %v1481 = vunpack.c.h.b16 %v852
      %v1482 = vunpack.c.l.b16 %v853
      %v1483 = vunpack.c.h.b16 %v853
      %v1484 = vunpack.c.l.b16 %v854
      %v1485 = vunpack.c.h.b16 %v854
      %v1486 = vunpack.c.l.b16 %v855
      %v1487 = vunpack.c.h.b16 %v855
      %v1488 = vunpack.c.l.b16 %v856
      %v1489 = vunpack.c.h.b16 %v856
      %v1490 = vunpack.c.l.b16 %v857
      %v1491 = vunpack.c.h.b16 %v857
      %v1492 = vunpack.c.l.b16 %v858
      %v1493 = vunpack.c.h.b16 %v858
      %v1494 = vunpack.c.l.b16 %v859
      %v1495 = vunpack.c.h.b16 %v859
      %v1496 = vunpack.c.l.b16 %v860
      %v1497 = vunpack.c.h.b16 %v860
      %v1498 = vunpack.c.l.b16 %v861
      %v1499 = vunpack.c.h.b16 %v861
      %v1500 = vunpack.c.l.b16 %v862
      %v1501 = vunpack.c.h.b16 %v862
      %v1502 = vunpack.c.l.b16 %v863
      %v1503 = vunpack.c.h.b16 %v863
      %v1504 = vunpack.c.l.b16 %v864
      %v1505 = vunpack.c.h.b16 %v864
      %v1506 = vunpack.c.l.b16 %v865
      %v1507 = vunpack.c.h.b16 %v865
      %v1508 = vunpack.c.l.b16 %v866
      %v1509 = vunpack.c.h.b16 %v866
      %v1510 = vunpack.c.l.b16 %v867
      %v1511 = vunpack.c.h.b16 %v867
      %v1512 = vunpack.c.l.b16 %v868
      %v1513 = vunpack.c.h.b16 %v868
      %v1514 = vunpack.c.l.b16 %v869
      %v1515 = vunpack.c.h.b16 %v869
      %v1516 = vunpack.c.l.b16 %v870
      %v1517 = vunpack.c.h.b16 %v870
      %v1518 = vunpack.c.l.b16 %v871
      %v1519 = vunpack.c.h.b16 %v871
      %v1520 = vunpack.c.l.b16 %v872
      %v1521 = vunpack.c.h.b16 %v872
      %v1522 = vunpack.c.l.b16 %v873
      %v1523 = vunpack.c.h.b16 %v873
      %v1524 = vunpack.c.l.b16 %v874
      %v1525 = vunpack.c.h.b16 %v874
      %v1526 = vunpack.c.l.b16 %v875
      %v1527 = vunpack.c.h.b16 %v875
      %v1528 = vunpack.c.l.b16 %v876
      %v1529 = vunpack.c.h.b16 %v876
      %v1530 = vunpack.c.l.b16 %v877
      %v1531 = vunpack.c.h.b16 %v877
      %v1532 = vunpack.c.l.b16 %v878
      %v1533 = vunpack.c.h.b16 %v878
      %v1534 = vunpack.c.l.b16 %v879
      %v1535 = vunpack.c.h.b16 %v879
      %v1536 = vunpack.c.l.b16 %v880
      %v1537 = vunpack.c.h.b16 %v880
      %v1538 = vunpack.c.l.b16 %v881
      %v1539 = vunpack.c.h.b16 %v881
      %v1540 = vunpack.c.l.b16 %v882
      %v1541 = vunpack.c.h.b16 %v882
      %v1542 = vunpack.c.l.b16 %v883
      %v1543 = vunpack.c.h.b16 %v883
      %v1544 = vunpack.c.l.b16 %v884
      %v1545 = vunpack.c.h.b16 %v884
      %v1546 = vunpack.c.l.b16 %v885
      %v1547 = vunpack.c.h.b16 %v885
      %v1548 = vunpack.c.l.b16 %v886
      %v1549 = vunpack.c.h.b16 %v886
      %v1550 = vunpack.c.l.b16 %v887
      %v1551 = vunpack.c.h.b16 %v887
      %v1552 = vunpack.c.l.b16 %v888
      %v1553 = vunpack.c.h.b16 %v888
      %v1554 = vunpack.c.l.b16 %v889
      %v1555 = vunpack.c.h.b16 %v889
      %v1556 = vunpack.c.l.b16 %v890
      %v1557 = vunpack.c.h.b16 %v890
      %v1558 = vunpack.c.l.b16 %v891
      %v1559 = vunpack.c.h.b16 %v891
      %v1560 = vunpack.c.l.b16 %v892
      %v1561 = vunpack.c.h.b16 %v892
      %v1562 = vunpack.c.l.b16 %v893
      %v1563 = vunpack.c.h.b16 %v893
      %v1564 = vunpack.c.l.b16 %v894
      %v1565 = vunpack.c.h.b16 %v894
      %v1566 = vunpack.c.l.b16 %v895
      %v1567 = vunpack.c.h.b16 %v895
      %v1568 = vunpack.c.l.b16 %v896
      %v1569 = vunpack.c.h.b16 %v896
      %v1570 = vunpack.c.l.b16 %v897
      %v1571 = vunpack.c.h.b16 %v897
      %v1572 = vunpack.c.l.b16 %v898
      %v1573 = vunpack.c.h.b16 %v898
      %v1574 = vunpack.c.l.b16 %v899
      %v1575 = vunpack.c.h.b16 %v899
      %v1576 = vunpack.c.l.b16 %v900
      %v1577 = vunpack.c.h.b16 %v900
      %v1578 = vunpack.c.l.b16 %v901
      %v1579 = vunpack.c.h.b16 %v901
      %v1580 = vunpack.c.l.b16 %v902
      %v1581 = vunpack.c.h.b16 %v902
      %v1582 = vunpack.c.l.b16 %v903
      %v1583 = vunpack.c.h.b16 %v903
      %v1584 = vunpack.c.l.b16 %v904
      %v1585 = vunpack.c.h.b16 %v904
      %v1586 = vunpack.c.l.b16 %v905
      %v1587 = vunpack.c.h.b16 %v905
      %v1588 = vunpack.c.l.b16 %v906
      %v1589 = vunpack.c.h.b16 %v906
      %v1590 = vunpack.c.l.b16 %v907
      %v1591 = vunpack.c.h.b16 %v907
      %v1592 = vunpack.c.l.b16 %v908
      %v1593 = vunpack.c.h.b16 %v908
      %v1594 = vunpack.c.l.b16 %v909
      %v1595 = vunpack.c.h.b16 %v909
      %v1596 = vunpack.c.l.b16 %v910
      %v1597 = vunpack.c.h.b16 %v910
      %v1598 = vunpack.c.l.b16 %v911
      %v1599 = vunpack.c.h.b16 %v911
      %v1600 = vunpack.c.l.b16 %v912
      %v1601 = vunpack.c.h.b16 %v912
      %v1602 = vunpack.c.l.b16 %v913
      %v1603 = vunpack.c.h.b16 %v913
      %v1604 = vunpack.c.l.b16 %v914
      %v1605 = vunpack.c.h.b16 %v914
      %v1606 = vunpack.c.l.b16 %v915
      %v1607 = vunpack.c.h.b16 %v915
      %v1608 = vunpack.c.l.b16 %v916
      %v1609 = vunpack.c.h.b16 %v916
      %v1610 = vunpack.c.l.b16 %v917
      %v1611 = vunpack.c.h.b16 %v917
      %v1612 = vunpack.c.l.b16 %v918
      %v1613 = vunpack.c.h.b16 %v918
      %v1614 = vunpack.c.l.b16 %v919
      %v1615 = vunpack.c.h.b16 %v919
      %v1616 = vunpack.c.l.b16 %v920
      %v1617 = vunpack.c.h.b16 %v920
      %v1618 = vunpack.c.l.b16 %v921
      %v1619 = vunpack.c.h.b16 %v921
      %v1620 = vunpack.c.l.b16 %v922
      %v1621 = vunpack.c.h.b16 %v922
      %v1622 = vunpack.c.l.b16 %v923
      %v1623 = vunpack.c.h.b16 %v923
      %v1624 = vunpack.c.l.b16 %v924
      %v1625 = vunpack.c.h.b16 %v924
      %v1626 = vunpack.c.l.b16 %v925
      %v1627 = vunpack.c.h.b16 %v925
      %v1628 = vunpack.c.l.b16 %v926
      %v1629 = vunpack.c.h.b16 %v926
      %v1630 = vunpack.c.l.b16 %v927
      %v1631 = vunpack.c.h.b16 %v927
      %v1632 = vunpack.c.l.b16 %v928
      %v1633 = vunpack.c.h.b16 %v928
      %v1634 = vunpack.c.l.b16 %v929
      %v1635 = vunpack.c.h.b16 %v929
      %v1636 = vunpack.c.l.b16 %v930
      %v1637 = vunpack.c.h.b16 %v930
      %v1638 = vunpack.c.l.b16 %v931
      %v1639 = vunpack.c.h.b16 %v931
      %v1640 = vunpack.c.l.b16 %v932
      %v1641 = vunpack.c.h.b16 %v932
      %v1642 = vunpack.c.l.b16 %v933
      %v1643 = vunpack.c.h.b16 %v933
      %v1644 = vunpack.c.l.b16 %v934
      %v1645 = vunpack.c.h.b16 %v934
      %v1646 = vunpack.c.l.b16 %v935
      %v1647 = vunpack.c.h.b16 %v935
      %v1648 = vunpack.c.l.b16 %v936
      %v1649 = vunpack.c.h.b16 %v936
      %v1650 = vunpack.c.l.b16 %v937
      %v1651 = vunpack.c.h.b16 %v937
      %v1652 = vunpack.c.l.b16 %v938
      %v1653 = vunpack.c.h.b16 %v938
      %v1654 = vunpack.c.l.b16 %v939
      %v1655 = vunpack.c.h.b16 %v939
      %v1656 = vunpack.c.l.b16 %v940
      %v1657 = vunpack.c.h.b16 %v940
      %v1658 = vunpack.c.l.b16 %v941
      %v1659 = vunpack.c.h.b16 %v941
      %v1660 = vunpack.c.l.b16 %v942
      %v1661 = vunpack.c.h.b16 %v942
      %v1662 = vunpack.c.l.b16 %v943
      %v1663 = vunpack.c.h.b16 %v943
      %v1664 = vunpack.c.l.b16 %v944
      %v1665 = vunpack.c.h.b16 %v944
      %v1666 = vunpack.c.l.b16 %v945
      %v1667 = vunpack.c.h.b16 %v945
      %v1668 = vunpack.c.l.b16 %v946
      %v1669 = vunpack.c.h.b16 %v946
      %v1670 = vunpack.c.l.b16 %v947
      %v1671 = vunpack.c.h.b16 %v947
      %v1672 = vunpack.c.l.b16 %v948
      %v1673 = vunpack.c.h.b16 %v948
      %v1674 = vunpack.c.l.b16 %v949
      %v1675 = vunpack.c.h.b16 %v949
      %v1676 = vunpack.c.l.b16 %v950
      %v1677 = vunpack.c.h.b16 %v950
      %v1678 = vunpack.c.l.b16 %v951
      %v1679 = vunpack.c.h.b16 %v951
      %v1680 = vunpack.c.l.b16 %v952
      %v1681 = vunpack.c.h.b16 %v952
      %v1682 = vunpack.c.l.b16 %v953
      %v1683 = vunpack.c.h.b16 %v953
      %v1684 = vunpack.c.l.b16 %v954
      %v1685 = vunpack.c.h.b16 %v954
      %v1686 = vunpack.c.l.b16 %v955
      %v1687 = vunpack.c.h.b16 %v955
      %v1688 = vunpack.c.l.b16 %v956
      %v1689 = vunpack.c.h.b16 %v956
      %v1690 = vunpack.c.l.b16 %v957
      %v1691 = vunpack.c.h.b16 %v957
      %v1692 = vunpack.c.l.b16 %v958
      %v1693 = vunpack.c.h.b16 %v958
      %v1694 = vunpack.c.l.b16 %v959
      %v1695 = vunpack.c.h.b16 %v959
      %v1696 = vunpack.c.l.b16 %v960
      %v1697 = vunpack.c.h.b16 %v960
      %v1698 = vunpack.c.l.b16 %v961
      %v1699 = vunpack.c.h.b16 %v961
      %v1700 = vunpack.c.l.b16 %v962
      %v1701 = vunpack.c.h.b16 %v962
      %v1702 = vunpack.c.l.b16 %v963
      %v1703 = vunpack.c.h.b16 %v963
      %v1704 = vunpack.c.l.b16 %v964
      %v1705 = vunpack.c.h.b16 %v964
      %v1706 = vunpack.c.l.b16 %v965
      %v1707 = vunpack.c.h.b16 %v965
      %v1708 = vunpack.c.l.b16 %v966
      %v1709 = vunpack.c.h.b16 %v966
      %v1710 = vunpack.c.l.b16 %v967
      %v1711 = vunpack.c.h.b16 %v967
      %v1712 = vunpack.c.l.b16 %v968
      %v1713 = vunpack.c.h.b16 %v968
      %v1714 = vunpack.c.l.b16 %v969
      %v1715 = vunpack.c.h.b16 %v969
      %v1716 = vunpack.c.l.b16 %v970
      %v1717 = vunpack.c.h.b16 %v970
      %v1718 = vunpack.c.l.b16 %v971
      %v1719 = vunpack.c.h.b16 %v971
      %v1720 = vunpack.c.l.b16 %v972
      %v1721 = vunpack.c.h.b16 %v972
      %v1722 = vunpack.c.l.b16 %v973
      %v1723 = vunpack.c.h.b16 %v973
      %v1724 = vunpack.c.l.b16 %v974
      %v1725 = vunpack.c.h.b16 %v974
      %v1726 = vunpack.c.l.b16 %v975
      %v1727 = vunpack.c.h.b16 %v975
      %v1728 = vunpack.c.l.b16 %v976
      %v1729 = vunpack.c.h.b16 %v976
      %v1730 = vunpack.c.l.b16 %v977
      %v1731 = vunpack.c.h.b16 %v977
      %v1732 = vunpack.c.l.b16 %v978
      %v1733 = vunpack.c.h.b16 %v978
      %v1734 = vunpack.c.l.b16 %v979
      %v1735 = vunpack.c.h.b16 %v979
      %v1736 = vunpack.c.l.b16 %v980
      %v1737 = vunpack.c.h.b16 %v980
      %v1738 = vunpack.c.l.b16 %v981
      %v1739 = vunpack.c.h.b16 %v981
      %v1740 = vunpack.c.l.b16 %v982
      %v1741 = vunpack.c.h.b16 %v982
      %v1742 = vunpack.c.l.b16 %v983
      %v1743 = vunpack.c.h.b16 %v983
      %v1744 = vunpack.c.l.b16 %v984
      %v1745 = vunpack.c.h.b16 %v984
      %v1746 = vunpack.c.l.b16 %v985
      %v1747 = vunpack.c.h.b16 %v985
      %v1748 = vunpack.c.l.b16 %v986
      %v1749 = vunpack.c.h.b16 %v986
      %v1750 = vunpack.c.l.b16 %v987
      %v1751 = vunpack.c.h.b16 %v987
      %v1752 = vunpack.c.l.b16 %v988
      %v1753 = vunpack.c.h.b16 %v988
      %v1754 = vunpack.c.l.b16 %v989
      %v1755 = vunpack.c.h.b16 %v989
      %v1756 = vunpack.c.l.b16 %v990
      %v1757 = vunpack.c.h.b16 %v990
      %v1758 = vunpack.c.l.b16 %v991
      %v1759 = vunpack.c.h.b16 %v991
      %v1760 = vunpack.c.l.b16 %v992
      %v1761 = vunpack.c.h.b16 %v992
      %v1762 = vunpack.c.l.b16 %v993
      %v1763 = vunpack.c.h.b16 %v993
      %v1764 = vunpack.c.l.b16 %v994
      %v1765 = vunpack.c.h.b16 %v994
      %v1766 = vunpack.c.l.b16 %v995
      %v1767 = vunpack.c.h.b16 %v995
      %v1768 = vunpack.c.l.b16 %v996
      %v1769 = vunpack.c.h.b16 %v996
      %v1770 = vunpack.c.l.b16 %v997
      %v1771 = vunpack.c.h.b16 %v997
      %v1772 = vunpack.c.l.b16 %v998
      %v1773 = vunpack.c.h.b16 %v998
      %v1774 = vunpack.c.l.b16 %v999
      %v1775 = vunpack.c.h.b16 %v999
      %v1776 = vunpack.c.l.b16 %v1000
      %v1777 = vunpack.c.h.b16 %v1000
      %v1778 = vunpack.c.l.b16 %v1001
      %v1779 = vunpack.c.h.b16 %v1001
      %v1780 = vunpack.c.l.b16 %v1002
      %v1781 = vunpack.c.h.b16 %v1002
      %v1782 = vunpack.c.l.b16 %v1003
      %v1783 = vunpack.c.h.b16 %v1003
      %v1784 = vunpack.c.l.b16 %v1004
      %v1785 = vunpack.c.h.b16 %v1004
      %v1786 = vunpack.c.l.b16 %v1005
      %v1787 = vunpack.c.h.b16 %v1005
      %v1788 = vunpack.c.l.b16 %v1006
      %v1789 = vunpack.c.h.b16 %v1006
      %v1790 = vunpack.c.l.b16 %v1007
      %v1791 = vunpack.c.h.b16 %v1007
      %v1792 = vunpack.c.l.b16 %v1008
      %v1793 = vunpack.c.h.b16 %v1008
      %v1794 = vunpack.c.l.b16 %v1009
      %v1795 = vunpack.c.h.b16 %v1009
      %v1796 = vunpack.c.l.b16 %v1010
      %v1797 = vunpack.c.h.b16 %v1010
      %v1798 = vunpack.c.l.b16 %v1011
      %v1799 = vunpack.c.h.b16 %v1011
      %v1800 = vunpack.c.l.b16 %v1012
      %v1801 = vunpack.c.h.b16 %v1012
      %v1802 = vunpack.c.l.b16 %v1013
      %v1803 = vunpack.c.h.b16 %v1013
      %v1804 = vunpack.c.l.b16 %v1014
      %v1805 = vunpack.c.h.b16 %v1014
      %v1806 = vunpack.c.l.b16 %v1015
      %v1807 = vunpack.c.h.b16 %v1015
      %v1808 = vunpack.c.l.b16 %v1016
      %v1809 = vunpack.c.h.b16 %v1016
      %v1810 = vunpack.c.l.b16 %v1017
      %v1811 = vunpack.c.h.b16 %v1017
      %v1812 = vunpack.c.l.b16 %v1018
      %v1813 = vunpack.c.h.b16 %v1018
      %v1814 = vunpack.c.l.b16 %v1019
      %v1815 = vunpack.c.h.b16 %v1019
      %v1816 = vunpack.c.l.b16 %v1020
      %v1817 = vunpack.c.h.b16 %v1020
      %v1818 = vunpack.c.l.b16 %v1021
      %v1819 = vunpack.c.h.b16 %v1021
      %v1820 = vunpack.c.l.b16 %v1022
      %v1821 = vunpack.c.h.b16 %v1022
      %v1822 = vunpack.c.l.b16 %v1023
      %v1823 = vunpack.c.h.b16 %v1023
      %v1824 = vunpack.c.l.b16 %v1024
      %v1825 = vunpack.c.h.b16 %v1024
      %v1826 = vunpack.c.l.b16 %v1025
      %v1827 = vunpack.c.h.b16 %v1025
      %v1828 = vunpack.c.l.b16 %v1026
      %v1829 = vunpack.c.h.b16 %v1026
      %v1830 = vunpack.c.l.b16 %v1027
      %v1831 = vunpack.c.h.b16 %v1027
      %v1832 = vunpack.c.l.b16 %v1028
      %v1833 = vunpack.c.h.b16 %v1028
      %v1834 = vunpack.c.l.b16 %v1029
      %v1835 = vunpack.c.h.b16 %v1029
      %v1836 = vunpack.c.l.b16 %v1030
      %v1837 = vunpack.c.h.b16 %v1030
      %v1838 = vunpack.c.l.b16 %v1031
      %v1839 = vunpack.c.h.b16 %v1031
      %v1840 = vunpack.c.l.b16 %v1032
      %v1841 = vunpack.c.h.b16 %v1032
      %v1842 = vunpack.c.l.b16 %v1033
      %v1843 = vunpack.c.h.b16 %v1033
      %v1844 = vpack.c.b16 %v1340, %v1332
      %v1845 = vpack.c.b16 %v1341, %v1333
      %v1846 = vpack.c.b16 %v1342, %v1334
      %v1847 = vpack.c.b16 %v1343, %v1335
      %v1848 = vpack.c.b16 %v1344, %v1336
      %v1849 = vpack.c.b16 %v1345, %v1337
      %v1850 = vpack.c.b16 %v1346, %v1338
      %v1851 = vpack.c.b16 %v1347, %v1339
      %v1852 = vpack.c.b16 %v1356, %v1348
      %v1853 = vpack.c.b16 %v1357, %v1349
      %v1854 = vpack.c.b16 %v1358, %v1350
      %v1855 = vpack.c.b16 %v1359, %v1351
      %v1856 = vpack.c.b16 %v1360, %v1352
      %v1857 = vpack.c.b16 %v1361, %v1353
      %v1858 = vpack.c.b16 %v1362, %v1354
      %v1859 = vpack.c.b16 %v1363, %v1355
      %v1860 = vpack.c.b16 %v1372, %v1364
      %v1861 = vpack.c.b16 %v1373, %v1365
      %v1862 = vpack.c.b16 %v1374, %v1366
      %v1863 = vpack.c.b16 %v1375, %v1367
      %v1864 = vpack.c.b16 %v1376, %v1368
      %v1865 = vpack.c.b16 %v1377, %v1369
      %v1866 = vpack.c.b16 %v1378, %v1370
      %v1867 = vpack.c.b16 %v1379, %v1371
      %v1868 = vpack.c.b16 %v1388, %v1380
      %v1869 = vpack.c.b16 %v1389, %v1381
      %v1870 = vpack.c.b16 %v1390, %v1382
      %v1871 = vpack.c.b16 %v1391, %v1383
      %v1872 = vpack.c.b16 %v1392, %v1384
      %v1873 = vpack.c.b16 %v1393, %v1385
      %v1874 = vpack.c.b16 %v1394, %v1386
      %v1875 = vpack.c.b16 %v1395, %v1387
      %v1876 = vpack.c.b16 %v1404, %v1396
      %v1877 = vpack.c.b16 %v1405, %v1397
      %v1878 = vpack.c.b16 %v1406, %v1398
      %v1879 = vpack.c.b16 %v1407, %v1399
      %v1880 = vpack.c.b16 %v1408, %v1400
      %v1881 = vpack.c.b16 %v1409, %v1401
      %v1882 = vpack.c.b16 %v1410, %v1402
      %v1883 = vpack.c.b16 %v1411, %v1403
      %v1884 = vpack.c.b16 %v1420, %v1412
      %v1885 = vpack.c.b16 %v1421, %v1413
      %v1886 = vpack.c.b16 %v1422, %v1414
      %v1887 = vpack.c.b16 %v1423, %v1415
      %v1888 = vpack.c.b16 %v1424, %v1416
      %v1889 = vpack.c.b16 %v1425, %v1417
      %v1890 = vpack.c.b16 %v1426, %v1418
      %v1891 = vpack.c.b16 %v1427, %v1419
      %v1892 = vpack.c.b16 %v1436, %v1428
      %v1893 = vpack.c.b16 %v1437, %v1429
      %v1894 = vpack.c.b16 %v1438, %v1430
      %v1895 = vpack.c.b16 %v1439, %v1431
      %v1896 = vpack.c.b16 %v1440, %v1432
      %v1897 = vpack.c.b16 %v1441, %v1433
      %v1898 = vpack.c.b16 %v1442, %v1434
      %v1899 = vpack.c.b16 %v1443, %v1435
      %v1900 = vpack.c.b16 %v1452, %v1444
      %v1901 = vpack.c.b16 %v1453, %v1445
      %v1902 = vpack.c.b16 %v1454, %v1446
      %v1903 = vpack.c.b16 %v1455, %v1447
      %v1904 = vpack.c.b16 %v1456, %v1448
      %v1905 = vpack.c.b16 %v1457, %v1449
      %v1906 = vpack.c.b16 %v1458, %v1450
      %v1907 = vpack.c.b16 %v1459, %v1451
      %v1908 = vpack.c.b16 %v1468, %v1460
      %v1909 = vpack.c.b16 %v1469, %v1461
      %v1910 = vpack.c.b16 %v1470, %v1462
      %v1911 = vpack.c.b16 %v1471, %v1463
      %v1912 = vpack.c.b16 %v1472, %v1464
      %v1913 = vpack.c.b16 %v1473, %v1465
      %v1914 = vpack.c.b16 %v1474, %v1466
      %v1915 = vpack.c.b16 %v1475, %v1467
      %v1916 = vpack.c.b16 %v1484, %v1476
      %v1917 = vpack.c.b16 %v1485, %v1477
      %v1918 = vpack.c.b16 %v1486, %v1478
      %v1919 = vpack.c.b16 %v1487, %v1479
      %v1920 = vpack.c.b16 %v1488, %v1480
      %v1921 = vpack.c.b16 %v1489, %v1481
      %v1922 = vpack.c.b16 %v1490, %v1482
      %v1923 = vpack.c.b16 %v1491, %v1483
      %v1924 = vpack.c.b16 %v1500, %v1492
      %v1925 = vpack.c.b16 %v1501, %v1493
      %v1926 = vpack.c.b16 %v1502, %v1494
      %v1927 = vpack.c.b16 %v1503, %v1495
      %v1928 = vpack.c.b16 %v1504, %v1496
      %v1929 = vpack.c.b16 %v1505, %v1497
      %v1930 = vpack.c.b16 %v1506, %v1498
      %v1931 = vpack.c.b16 %v1507, %v1499
      %v1932 = vpack.c.b16 %v1516, %v1508
      %v1933 = vpack.c.b16 %v1517, %v1509
      %v1934 = vpack.c.b16 %v1518, %v1510
      %v1935 = vpack.c.b16 %v1519, %v1511
      %v1936 = vpack.c.b16 %v1520, %v1512
      %v1937 = vpack.c.b16 %v1521, %v1513
      %v1938 = vpack.c.b16 %v1522, %v1514
      %v1939 = vpack.c.b16 %v1523, %v1515
      %v1940 = vpack.c.b16 %v1532, %v1524
      %v1941 = vpack.c.b16 %v1533, %v1525
      %v1942 = vpack.c.b16 %v1534, %v1526
      %v1943 = vpack.c.b16 %v1535, %v1527
      %v1944 = vpack.c.b16 %v1536, %v1528
      %v1945 = vpack.c.b16 %v1537, %v1529
      %v1946 = vpack.c.b16 %v1538, %v1530
      %v1947 = vpack.c.b16 %v1539, %v1531
      %v1948 = vpack.c.b16 %v1548, %v1540
      %v1949 = vpack.c.b16 %v1549, %v1541
      %v1950 = vpack.c.b16 %v1550, %v1542
      %v1951 = vpack.c.b16 %v1551, %v1543
      %v1952 = vpack.c.b16 %v1552, %v1544
      %v1953 = vpack.c.b16 %v1553, %v1545
      %v1954 = vpack.c.b16 %v1554, %v1546
      %v1955 = vpack.c.b16 %v1555, %v1547
      %v1956 = vpack.c.b16 %v1564, %v1556
      %v1957 = vpack.c.b16 %v1565, %v1557
      %v1958 = vpack.c.b16 %v1566, %v1558
      %v1959 = vpack.c.b16 %v1567, %v1559
      %v1960 = vpack.c.b16 %v1568, %v1560
      %v1961 = vpack.c.b16 %v1569, %v1561
      %v1962 = vpack.c.b16 %v1570, %v1562
      %v1963 = vpack.c.b16 %v1571, %v1563
      %v1964 = vpack.c.b16 %v1580, %v1572
      %v1965 = vpack.c.b16 %v1581, %v1573
      %v1966 = vpack.c.b16 %v1582, %v1574
      %v1967 = vpack.c.b16 %v1583, %v1575
      %v1968 = vpack.c.b16 %v1584, %v1576
      %v1969 = vpack.c.b16 %v1585, %v1577
      %v1970 = vpack.c.b16 %v1586, %v1578
      %v1971 = vpack.c.b16 %v1587, %v1579
      %v1972 = vpack.c.b16 %v1596, %v1588
      %v1973 = vpack.c.b16 %v1597, %v1589
      %v1974 = vpack.c.b16 %v1598, %v1590
      %v1975 = vpack.c.b16 %v1599, %v1591
      %v1976 = vpack.c.b16 %v1600, %v1592
      %v1977 = vpack.c.b16 %v1601, %v1593
      %v1978 = vpack.c.b16 %v1602, %v1594
      %v1979 = vpack.c.b16 %v1603, %v1595
      %v1980 = vpack.c.b16 %v1612, %v1604
      %v1981 = vpack.c.b16 %v1613, %v1605
      %v1982 = vpack.c.b16 %v1614, %v1606
      %v1983 = vpack.c.b16 %v1615, %v1607
      %v1984 = vpack.c.b16 %v1616, %v1608
      %v1985 = vpack.c.b16 %v1617, %v1609
      %v1986 = vpack.c.b16 %v1618, %v1610
      %v1987 = vpack.c.b16 %v1619, %v1611
      %v1988 = vpack.c.b16 %v1628, %v1620
      %v1989 = vpack.c.b16 %v1629, %v1621
      %v1990 = vpack.c.b16 %v1630, %v1622
      %v1991 = vpack.c.b16 %v1631, %v1623
      %v1992 = vpack.c.b16 %v1632, %v1624
      %v1993 = vpack.c.b16 %v1633, %v1625
      %v1994 = vpack.c.b16 %v1634, %v1626
      %v1995 = vpack.c.b16 %v1635, %v1627
      %v1996 = vpack.c.b16 %v1644, %v1636
      %v1997 = vpack.c.b16 %v1645, %v1637
      %v1998 = vpack.c.b16 %v1646, %v1638
      %v1999 = vpack.c.b16 %v1647, %v1639
      %v2000 = vpack.c.b16 %v1648, %v1640
      %v2001 = vpack.c.b16 %v1649, %v1641
      %v2002 = vpack.c.b16 %v1650, %v1642
      %v2003 = vpack.c.b16 %v1651, %v1643
      %v2004 = vpack.c.b16 %v1660, %v1652
      %v2005 = vpack.c.b16 %v1661, %v1653
      %v2006 = vpack.c.b16 %v1662, %v1654
      %v2007 = vpack.c.b16 %v1663, %v1655
      %v2008 = vpack.c.b16 %v1664, %v1656
      %v2009 = vpack.c.b16 %v1665, %v1657
      %v2010 = vpack.c.b16 %v1666, %v1658
      %v2011 = vpack.c.b16 %v1667, %v1659
      %v2012 = vpack.c.b16 %v1676, %v1668
      %v2013 = vpack.c.b16 %v1677, %v1669
      %v2014 = vpack.c.b16 %v1678, %v1670
      %v2015 = vpack.c.b16 %v1679, %v1671
      %v2016 = vpack.c.b16 %v1680, %v1672
      %v2017 = vpack.c.b16 %v1681, %v1673
      %v2018 = vpack.c.b16 %v1682, %v1674
      %v2019 = vpack.c.b16 %v1683, %v1675
      %v2020 = vpack.c.b16 %v1692, %v1684
      %v2021 = vpack.c.b16 %v1693, %v1685
      %v2022 = vpack.c.b16 %v1694, %v1686
      %v2023 = vpack.c.b16 %v1695, %v1687
      %v2024 = vpack.c.b16 %v1696, %v1688
      %v2025 = vpack.c.b16 %v1697, %v1689
      %v2026 = vpack.c.b16 %v1698, %v1690
      %v2027 = vpack.c.b16 %v1699, %v1691
      %v2028 = vpack.c.b16 %v1708, %v1700
      %v2029 = vpack.c.b16 %v1709, %v1701
      %v2030 = vpack.c.b16 %v1710, %v1702
      %v2031 = vpack.c.b16 %v1711, %v1703
      %v2032 = vpack.c.b16 %v1712, %v1704
      %v2033 = vpack.c.b16 %v1713, %v1705
      %v2034 = vpack.c.b16 %v1714, %v1706
      %v2035 = vpack.c.b16 %v1715, %v1707
      %v2036 = vpack.c.b16 %v1724, %v1716
      %v2037 = vpack.c.b16 %v1725, %v1717
      %v2038 = vpack.c.b16 %v1726, %v1718
      %v2039 = vpack.c.b16 %v1727, %v1719
      %v2040 = vpack.c.b16 %v1728, %v1720
      %v2041 = vpack.c.b16 %v1729, %v1721
      %v2042 = vpack.c.b16 %v1730, %v1722
      %v2043 = vpack.c.b16 %v1731, %v1723
      %v2044 = vpack.c.b16 %v1740, %v1732
      %v2045 = vpack.c.b16 %v1741, %v1733
      %v2046 = vpack.c.b16 %v1742, %v1734
      %v2047 = vpack.c.b16 %v1743, %v1735
      %v2048 = vpack.c.b16 %v1744, %v1736
      %v2049 = vpack.c.b16 %v1745, %v1737
      %v2050 = vpack.c.b16 %v1746, %v1738
      %v2051 = vpack.c.b16 %v1747, %v1739
      %v2052 = vpack.c.b16 %v1756, %v1748
      %v2053 = vpack.c.b16 %v1757, %v1749
      %v2054 = vpack.c.b16 %v1758, %v1750
      %v2055 = vpack.c.b16 %v1759, %v1751
      %v2056 = vpack.c.b16 %v1760, %v1752
      %v2057 = vpack.c.b16 %v1761, %v1753
      %v2058 = vpack.c.b16 %v1762, %v1754
      %v2059 = vpack.c.b16 %v1763, %v1755
      %v2060 = vpack.c.b16 %v1772, %v1764
      %v2061 = vpack.c.b16 %v1773, %v1765
      %v2062 = vpack.c.b16 %v1774, %v1766
      %v2063 = vpack.c.b16 %v1775, %v1767
      %v2064 = vpack.c.b16 %v1776, %v1768
      %v2065 = vpack.c.b16 %v1777, %v1769
      %v2066 = vpack.c.b16 %v1778, %v1770
      %v2067 = vpack.c.b16 %v1779, %v1771
      %v2068 = vpack.c.b16 %v1788, %v1780
      %v2069 = vpack.c.b16 %v1789, %v1781
      %v2070 = vpack.c.b16 %v1790, %v1782
      %v2071 = vpack.c.b16 %v1791, %v1783
      %v2072 = vpack.c.b16 %v1792, %v1784
      %v2073 = vpack.c.b16 %v1793, %v1785
      %v2074 = vpack.c.b16 %v1794, %v1786
      %v2075 = vpack.c.b16 %v1795, %v1787
      %v2076 = vpack.c.b16 %v1804, %v1796
      %v2077 = vpack.c.b16 %v1805, %v1797
      %v2078 = vpack.c.b16 %v1806, %v1798
      %v2079 = vpack.c.b16 %v1807, %v1799
      %v2080 = vpack.c.b16 %v1808, %v1800
      %v2081 = vpack.c.b16 %v1809, %v1801
      %v2082 = vpack.c.b16 %v1810, %v1802
      %v2083 = vpack.c.b16 %v1811, %v1803
      %v2084 = vpack.c.b16 %v1820, %v1812
      %v2085 = vpack.c.b16 %v1821, %v1813
      %v2086 = vpack.c.b16 %v1822, %v1814
      %v2087 = vpack.c.b16 %v1823, %v1815
      %v2088 = vpack.c.b16 %v1824, %v1816
      %v2089 = vpack.c.b16 %v1825, %v1817
      %v2090 = vpack.c.b16 %v1826, %v1818
      %v2091 = vpack.c.b16 %v1827, %v1819
      %v2092 = vpack.c.b16 %v1836, %v1828
      %v2093 = vpack.c.b16 %v1837, %v1829
      %v2094 = vpack.c.b16 %v1838, %v1830
      %v2095 = vpack.c.b16 %v1839, %v1831
      %v2096 = vpack.c.b16 %v1840, %v1832
      %v2097 = vpack.c.b16 %v1841, %v1833
      %v2098 = vpack.c.b16 %v1842, %v1834
      %v2099 = vpack.c.b16 %v1843, %v1835
      %2356 = vmatprep.subr.bf16.mxu0 %v1901
      %2357 = vmatpush1.bf16.msra.mxu0 %v1900
      %2358 = vmatprep.subr.bf16.mxu0 %v1893
      %2359 = vmatpush1.bf16.msra.mxu0 %v1892
      %2360 = vmatprep.subr.bf16.mxu0 %v1885
      %2361 = vmatpush1.bf16.msra.mxu0 %v1884
      %2362 = vmatprep.subr.bf16.mxu0 %v1877
      %2363 = vmatpush1.bf16.msra.mxu0 %v1876
      %2364 = vmatprep.subr.bf16.mxu0 %v1869
      %2365 = vmatpush1.bf16.msra.mxu0 %v1868
      %2366 = vmatprep.subr.bf16.mxu0 %v1861
      %2367 = vmatpush1.bf16.msra.mxu0 %v1860
      %2368 = vmatprep.subr.bf16.mxu0 %v1853
      %2369 = vmatpush1.bf16.msra.mxu0 %v1852
      %2370 = vmatprep.subr.bf16.mxu0 %v1845
      %2371 = vmatpush1.bf16.msra.mxu0 %v1844
      %2372 = vmatprep.subr.bf16.mxu0 %v1965
      %2373 = vmatpush2.bf16.msra.mxu0 %v1964
      %2374 = vmatprep.subr.bf16.mxu0 %v1957
      %2375 = vmatpush2.bf16.msra.mxu0 %v1956
      %2376 = vmatprep.subr.bf16.mxu0 %v1949
      %2377 = vmatpush2.bf16.msra.mxu0 %v1948
      %2378 = vmatprep.subr.bf16.mxu0 %v1941
      %2379 = vmatpush2.bf16.msra.mxu0 %v1940
      %2380 = vmatprep.subr.bf16.mxu0 %v1933
      %2381 = vmatpush2.bf16.msra.mxu0 %v1932
      %2382 = vmatprep.subr.bf16.mxu0 %v1925
      %2383 = vmatpush2.bf16.msra.mxu0 %v1924
      %2384 = vmatprep.subr.bf16.mxu0 %v1917
      %2385 = vmatpush2.bf16.msra.mxu0 %v1916
      %2386 = vmatprep.subr.bf16.mxu0 %v1909
      %2387 = vmatpush2.bf16.msra.mxu0 %v1908
      %2388 = vmatprep.mubr.bf16.mxu0 %v775
      %2389 = vmatmul.mubr.bf16.gmra.mxu0 %v774
      %v2390 = vpop.f32.mrf.mxu0
      %v2391 = vadd.f32 %v1039, %v2390
      %v2392 = vpop.f32.mrf.mxu0
      %v2393 = vadd.f32 %v1043, %v2392
      %v2394 = vpop.f32.mrf.mxu0
      %v2395 = vpop.f32.mrf.mxu0
      %2396 = vdwg.mxu0
      %2397 = vmatprep.subr.bf16.mxu0 %v2029
      %2398 = vmatpush1.bf16.msra.mxu0 %v2028
      %2399 = vmatprep.subr.bf16.mxu0 %v2021
      %2400 = vmatpush1.bf16.msra.mxu0 %v2020
      %2401 = vmatprep.subr.bf16.mxu0 %v2013
      %2402 = vmatpush1.bf16.msra.mxu0 %v2012
      %2403 = vmatprep.subr.bf16.mxu0 %v2005
      %2404 = vmatpush1.bf16.msra.mxu0 %v2004
      %2405 = vmatprep.subr.bf16.mxu0 %v1997
      %2406 = vmatpush1.bf16.msra.mxu0 %v1996
      %2407 = vmatprep.subr.bf16.mxu0 %v1989
      %2408 = vmatpush1.bf16.msra.mxu0 %v1988
      %2409 = vmatprep.subr.bf16.mxu0 %v1981
      %2410 = vmatpush1.bf16.msra.mxu0 %v1980
      %2411 = vmatprep.subr.bf16.mxu0 %v1973
      %2412 = vmatpush1.bf16.msra.mxu0 %v1972
      %2413 = vmatprep.subr.bf16.mxu0 %v2093
      %2414 = vmatpush2.bf16.msra.mxu0 %v2092
      %2415 = vmatprep.subr.bf16.mxu0 %v2085
      %2416 = vmatpush2.bf16.msra.mxu0 %v2084
      %2417 = vmatprep.subr.bf16.mxu0 %v2077
      %2418 = vmatpush2.bf16.msra.mxu0 %v2076
      %2419 = vmatprep.subr.bf16.mxu0 %v2069
      %2420 = vmatpush2.bf16.msra.mxu0 %v2068
      %2421 = vmatprep.subr.bf16.mxu0 %v2061
      %2422 = vmatpush2.bf16.msra.mxu0 %v2060
      %2423 = vmatprep.subr.bf16.mxu0 %v2053
      %2424 = vmatpush2.bf16.msra.mxu0 %v2052
      %2425 = vmatprep.subr.bf16.mxu0 %v2045
      %2426 = vmatpush2.bf16.msra.mxu0 %v2044
      %2427 = vmatprep.subr.bf16.mxu0 %v2037
      %2428 = vmatpush2.bf16.msra.mxu0 %v2036
      %2429 = vmatprep.mubr.bf16.mxu0 %v777
      %2430 = vmatmul.mubr.bf16.gmra.mxu0 %v776
      %v2431 = vpop.f32.mrf.mxu0
      %v2432 = vadd.f32 %v2391, %v2431
      %v2433 = vpop.f32.mrf.mxu0
      %v2434 = vadd.f32 %v2393, %v2433
      %v2435 = vpop.f32.mrf.mxu0
      %v2436 = vpop.f32.mrf.mxu0
      %2437 = vdwg.mxu0
      %2438 = vmatprep.subr.bf16.mxu0 %v1903
      %2439 = vmatpush1.bf16.msra.mxu0 %v1902
      %2440 = vmatprep.subr.bf16.mxu0 %v1895
      %2441 = vmatpush1.bf16.msra.mxu0 %v1894
      %2442 = vmatprep.subr.bf16.mxu0 %v1887
      %2443 = vmatpush1.bf16.msra.mxu0 %v1886
      %2444 = vmatprep.subr.bf16.mxu0 %v1879
      %2445 = vmatpush1.bf16.msra.mxu0 %v1878
      %2446 = vmatprep.subr.bf16.mxu0 %v1871
      %2447 = vmatpush1.bf16.msra.mxu0 %v1870
      %2448 = vmatprep.subr.bf16.mxu0 %v1863
      %2449 = vmatpush1.bf16.msra.mxu0 %v1862
      %2450 = vmatprep.subr.bf16.mxu0 %v1855
      %2451 = vmatpush1.bf16.msra.mxu0 %v1854
      %2452 = vmatprep.subr.bf16.mxu0 %v1847
      %2453 = vmatpush1.bf16.msra.mxu0 %v1846
      %2454 = vmatprep.subr.bf16.mxu0 %v1967
      %2455 = vmatpush2.bf16.msra.mxu0 %v1966
      %2456 = vmatprep.subr.bf16.mxu0 %v1959
      %2457 = vmatpush2.bf16.msra.mxu0 %v1958
      %2458 = vmatprep.subr.bf16.mxu0 %v1951
      %2459 = vmatpush2.bf16.msra.mxu0 %v1950
      %2460 = vmatprep.subr.bf16.mxu0 %v1943
      %2461 = vmatpush2.bf16.msra.mxu0 %v1942
      %2462 = vmatprep.subr.bf16.mxu0 %v1935
      %2463 = vmatpush2.bf16.msra.mxu0 %v1934
      %2464 = vmatprep.subr.bf16.mxu0 %v1927
      %2465 = vmatpush2.bf16.msra.mxu0 %v1926
      %2466 = vmatprep.subr.bf16.mxu0 %v1919
      %2467 = vmatpush2.bf16.msra.mxu0 %v1918
      %2468 = vmatprep.subr.bf16.mxu0 %v1911
      %2469 = vmatpush2.bf16.msra.mxu0 %v1910
      %2470 = vmatprep.mubr.bf16.mxu0 %v775
      %2471 = vmatmul.mubr.bf16.gmra.mxu0 %v774
      %v2472 = vpop.f32.mrf.mxu0
      %v2473 = vadd.f32 %v1047, %v2472
      %v2474 = vpop.f32.mrf.mxu0
      %v2475 = vadd.f32 %v1051, %v2474
      %v2476 = vpop.f32.mrf.mxu0
      %v2477 = vpop.f32.mrf.mxu0
      %2478 = vdwg.mxu0
      %2479 = vmatprep.subr.bf16.mxu0 %v2031
      %2480 = vmatpush1.bf16.msra.mxu0 %v2030
      %2481 = vmatprep.subr.bf16.mxu0 %v2023
      %2482 = vmatpush1.bf16.msra.mxu0 %v2022
      %2483 = vmatprep.subr.bf16.mxu0 %v2015
      %2484 = vmatpush1.bf16.msra.mxu0 %v2014
      %2485 = vmatprep.subr.bf16.mxu0 %v2007
      %2486 = vmatpush1.bf16.msra.mxu0 %v2006
      %2487 = vmatprep.subr.bf16.mxu0 %v1999
      %2488 = vmatpush1.bf16.msra.mxu0 %v1998
      %2489 = vmatprep.subr.bf16.mxu0 %v1991
      %2490 = vmatpush1.bf16.msra.mxu0 %v1990
      %2491 = vmatprep.subr.bf16.mxu0 %v1983
      %2492 = vmatpush1.bf16.msra.mxu0 %v1982
      %2493 = vmatprep.subr.bf16.mxu0 %v1975
      %2494 = vmatpush1.bf16.msra.mxu0 %v1974
      %2495 = vmatprep.subr.bf16.mxu0 %v2095
      %2496 = vmatpush2.bf16.msra.mxu0 %v2094
      %2497 = vmatprep.subr.bf16.mxu0 %v2087
      %2498 = vmatpush2.bf16.msra.mxu0 %v2086
      %2499 = vmatprep.subr.bf16.mxu0 %v2079
      %2500 = vmatpush2.bf16.msra.mxu0 %v2078
      %2501 = vmatprep.subr.bf16.mxu0 %v2071
      %2502 = vmatpush2.bf16.msra.mxu0 %v2070
      %2503 = vmatprep.subr.bf16.mxu0 %v2063
      %2504 = vmatpush2.bf16.msra.mxu0 %v2062
      %2505 = vmatprep.subr.bf16.mxu0 %v2055
      %2506 = vmatpush2.bf16.msra.mxu0 %v2054
      %2507 = vmatprep.subr.bf16.mxu0 %v2047
      %2508 = vmatpush2.bf16.msra.mxu0 %v2046
      %2509 = vmatprep.subr.bf16.mxu0 %v2039
      %2510 = vmatpush2.bf16.msra.mxu0 %v2038
      %2511 = vmatprep.mubr.bf16.mxu0 %v777
      %2512 = vmatmul.mubr.bf16.gmra.mxu0 %v776
      %v2513 = vpop.f32.mrf.mxu0
      %v2514 = vadd.f32 %v2473, %v2513
      %v2515 = vpop.f32.mrf.mxu0
      %v2516 = vadd.f32 %v2475, %v2515
      %v2517 = vpop.f32.mrf.mxu0
      %v2518 = vpop.f32.mrf.mxu0
      %2519 = vdwg.mxu0
      %2520 = vmatprep.subr.bf16.mxu0 %v1905
      %2521 = vmatpush1.bf16.msra.mxu0 %v1904
      %2522 = vmatprep.subr.bf16.mxu0 %v1897
      %2523 = vmatpush1.bf16.msra.mxu0 %v1896
      %2524 = vmatprep.subr.bf16.mxu0 %v1889
      %2525 = vmatpush1.bf16.msra.mxu0 %v1888
      %2526 = vmatprep.subr.bf16.mxu0 %v1881
      %2527 = vmatpush1.bf16.msra.mxu0 %v1880
      %2528 = vmatprep.subr.bf16.mxu0 %v1873
      %2529 = vmatpush1.bf16.msra.mxu0 %v1872
      %2530 = vmatprep.subr.bf16.mxu0 %v1865
      %2531 = vmatpush1.bf16.msra.mxu0 %v1864
      %2532 = vmatprep.subr.bf16.mxu0 %v1857
      %2533 = vmatpush1.bf16.msra.mxu0 %v1856
      %2534 = vmatprep.subr.bf16.mxu0 %v1849
      %2535 = vmatpush1.bf16.msra.mxu0 %v1848
      %2536 = vmatprep.subr.bf16.mxu0 %v1969
      %2537 = vmatpush2.bf16.msra.mxu0 %v1968
      %2538 = vmatprep.subr.bf16.mxu0 %v1961
      %2539 = vmatpush2.bf16.msra.mxu0 %v1960
      %2540 = vmatprep.subr.bf16.mxu0 %v1953
      %2541 = vmatpush2.bf16.msra.mxu0 %v1952
      %2542 = vmatprep.subr.bf16.mxu0 %v1945
      %2543 = vmatpush2.bf16.msra.mxu0 %v1944
      %2544 = vmatprep.subr.bf16.mxu0 %v1937
      %2545 = vmatpush2.bf16.msra.mxu0 %v1936
      %2546 = vmatprep.subr.bf16.mxu0 %v1929
      %2547 = vmatpush2.bf16.msra.mxu0 %v1928
      %2548 = vmatprep.subr.bf16.mxu0 %v1921
      %2549 = vmatpush2.bf16.msra.mxu0 %v1920
      %2550 = vmatprep.subr.bf16.mxu0 %v1913
      %2551 = vmatpush2.bf16.msra.mxu0 %v1912
      %2552 = vmatprep.mubr.bf16.mxu0 %v775
      %2553 = vmatmul.mubr.bf16.gmra.mxu0 %v774
      %v2554 = vpop.f32.mrf.mxu0
      %v2555 = vadd.f32 %v1055, %v2554
      %v2556 = vpop.f32.mrf.mxu0
      %v2557 = vadd.f32 %v1059, %v2556
      %v2558 = vpop.f32.mrf.mxu0
      %v2559 = vpop.f32.mrf.mxu0
      %2560 = vdwg.mxu0
      %2561 = vmatprep.subr.bf16.mxu0 %v2033
      %2562 = vmatpush1.bf16.msra.mxu0 %v2032
      %2563 = vmatprep.subr.bf16.mxu0 %v2025
      %2564 = vmatpush1.bf16.msra.mxu0 %v2024
      %2565 = vmatprep.subr.bf16.mxu0 %v2017
      %2566 = vmatpush1.bf16.msra.mxu0 %v2016
      %2567 = vmatprep.subr.bf16.mxu0 %v2009
      %2568 = vmatpush1.bf16.msra.mxu0 %v2008
      %2569 = vmatprep.subr.bf16.mxu0 %v2001
      %2570 = vmatpush1.bf16.msra.mxu0 %v2000
      %2571 = vmatprep.subr.bf16.mxu0 %v1993
      %2572 = vmatpush1.bf16.msra.mxu0 %v1992
      %2573 = vmatprep.subr.bf16.mxu0 %v1985
      %2574 = vmatpush1.bf16.msra.mxu0 %v1984
      %2575 = vmatprep.subr.bf16.mxu0 %v1977
      %2576 = vmatpush1.bf16.msra.mxu0 %v1976
      %2577 = vmatprep.subr.bf16.mxu0 %v2097
      %2578 = vmatpush2.bf16.msra.mxu0 %v2096
      %2579 = vmatprep.subr.bf16.mxu0 %v2089
      %2580 = vmatpush2.bf16.msra.mxu0 %v2088
      %2581 = vmatprep.subr.bf16.mxu0 %v2081
      %2582 = vmatpush2.bf16.msra.mxu0 %v2080
      %2583 = vmatprep.subr.bf16.mxu0 %v2073
      %2584 = vmatpush2.bf16.msra.mxu0 %v2072
      %2585 = vmatprep.subr.bf16.mxu0 %v2065
      %2586 = vmatpush2.bf16.msra.mxu0 %v2064
      %2587 = vmatprep.subr.bf16.mxu0 %v2057
      %2588 = vmatpush2.bf16.msra.mxu0 %v2056
      %2589 = vmatprep.subr.bf16.mxu0 %v2049
      %2590 = vmatpush2.bf16.msra.mxu0 %v2048
      %2591 = vmatprep.subr.bf16.mxu0 %v2041
      %2592 = vmatpush2.bf16.msra.mxu0 %v2040
      %2593 = vmatprep.mubr.bf16.mxu0 %v777
      %2594 = vmatmul.mubr.bf16.gmra.mxu0 %v776
      %v2595 = vpop.f32.mrf.mxu0
      %v2596 = vadd.f32 %v2555, %v2595
      %v2597 = vpop.f32.mrf.mxu0
      %v2598 = vadd.f32 %v2557, %v2597
      %v2599 = vpop.f32.mrf.mxu0
      %v2600 = vpop.f32.mrf.mxu0
      %2601 = vdwg.mxu0
      %2602 = vmatprep.subr.bf16.mxu0 %v1907
      %2603 = vmatpush1.bf16.msra.mxu0 %v1906
      %2604 = vmatprep.subr.bf16.mxu0 %v1899
      %2605 = vmatpush1.bf16.msra.mxu0 %v1898
      %2606 = vmatprep.subr.bf16.mxu0 %v1891
      %2607 = vmatpush1.bf16.msra.mxu0 %v1890
      %2608 = vmatprep.subr.bf16.mxu0 %v1883
      %2609 = vmatpush1.bf16.msra.mxu0 %v1882
      %2610 = vmatprep.subr.bf16.mxu0 %v1875
      %2611 = vmatpush1.bf16.msra.mxu0 %v1874
      %2612 = vmatprep.subr.bf16.mxu0 %v1867
      %2613 = vmatpush1.bf16.msra.mxu0 %v1866
      %2614 = vmatprep.subr.bf16.mxu0 %v1859
      %2615 = vmatpush1.bf16.msra.mxu0 %v1858
      %2616 = vmatprep.subr.bf16.mxu0 %v1851
      %2617 = vmatpush1.bf16.msra.mxu0 %v1850
      %2618 = vmatprep.subr.bf16.mxu0 %v1971
      %2619 = vmatpush2.bf16.msra.mxu0 %v1970
      %2620 = vmatprep.subr.bf16.mxu0 %v1963
      %2621 = vmatpush2.bf16.msra.mxu0 %v1962
      %2622 = vmatprep.subr.bf16.mxu0 %v1955
      %2623 = vmatpush2.bf16.msra.mxu0 %v1954
      %2624 = vmatprep.subr.bf16.mxu0 %v1947
      %2625 = vmatpush2.bf16.msra.mxu0 %v1946
      %2626 = vmatprep.subr.bf16.mxu0 %v1939
      %2627 = vmatpush2.bf16.msra.mxu0 %v1938
      %2628 = vmatprep.subr.bf16.mxu0 %v1931
      %2629 = vmatpush2.bf16.msra.mxu0 %v1930
      %2630 = vmatprep.subr.bf16.mxu0 %v1923
      %2631 = vmatpush2.bf16.msra.mxu0 %v1922
      %2632 = vmatprep.subr.bf16.mxu0 %v1915
      %2633 = vmatpush2.bf16.msra.mxu0 %v1914
      %2634 = vmatprep.mubr.bf16.mxu0 %v775
      %2635 = vmatmul.mubr.bf16.gmra.mxu0 %v774
      %v2636 = vpop.f32.mrf.mxu0
      %v2637 = vadd.f32 %v1063, %v2636
      %v2638 = vpop.f32.mrf.mxu0
      %v2639 = vadd.f32 %v1067, %v2638
      %v2640 = vpop.f32.mrf.mxu0
      %v2641 = vpop.f32.mrf.mxu0
      %2642 = vdwg.mxu0
      %2643 = vmatprep.subr.bf16.mxu0 %v2035
      %2644 = vmatpush1.bf16.msra.mxu0 %v2034
      %2645 = vmatprep.subr.bf16.mxu0 %v2027
      %2646 = vmatpush1.bf16.msra.mxu0 %v2026
      %2647 = vmatprep.subr.bf16.mxu0 %v2019
      %2648 = vmatpush1.bf16.msra.mxu0 %v2018
      %2649 = vmatprep.subr.bf16.mxu0 %v2011
      %2650 = vmatpush1.bf16.msra.mxu0 %v2010
      %2651 = vmatprep.subr.bf16.mxu0 %v2003
      %2652 = vmatpush1.bf16.msra.mxu0 %v2002
      %2653 = vmatprep.subr.bf16.mxu0 %v1995
      %2654 = vmatpush1.bf16.msra.mxu0 %v1994
      %2655 = vmatprep.subr.bf16.mxu0 %v1987
      %2656 = vmatpush1.bf16.msra.mxu0 %v1986
      %2657 = vmatprep.subr.bf16.mxu0 %v1979
      %2658 = vmatpush1.bf16.msra.mxu0 %v1978
      %2659 = vmatprep.subr.bf16.mxu0 %v2099
      %2660 = vmatpush2.bf16.msra.mxu0 %v2098
      %2661 = vmatprep.subr.bf16.mxu0 %v2091
      %2662 = vmatpush2.bf16.msra.mxu0 %v2090
      %2663 = vmatprep.subr.bf16.mxu0 %v2083
      %2664 = vmatpush2.bf16.msra.mxu0 %v2082
      %2665 = vmatprep.subr.bf16.mxu0 %v2075
      %2666 = vmatpush2.bf16.msra.mxu0 %v2074
      %2667 = vmatprep.subr.bf16.mxu0 %v2067
      %2668 = vmatpush2.bf16.msra.mxu0 %v2066
      %2669 = vmatprep.subr.bf16.mxu0 %v2059
      %2670 = vmatpush2.bf16.msra.mxu0 %v2058
      %2671 = vmatprep.subr.bf16.mxu0 %v2051
      %2672 = vmatpush2.bf16.msra.mxu0 %v2050
      %2673 = vmatprep.subr.bf16.mxu0 %v2043
      %2674 = vmatpush2.bf16.msra.mxu0 %v2042
      %2675 = vmatprep.mubr.bf16.mxu0 %v777
      %2676 = vmatmul.mubr.bf16.gmra.mxu0 %v776
      %v2677 = vpop.f32.mrf.mxu0
      %v2678 = vadd.f32 %v2637, %v2677
      %v2679 = vpop.f32.mrf.mxu0
      %v2680 = vadd.f32 %v2639, %v2679
      %v2681 = vpop.f32.mrf.mxu0
      %v2682 = vpop.f32.mrf.mxu0
      %2683 = vdwg.mxu0
      %vm2684 = vcmp.gt.f32.partialorder %v2432, 0.0
      %vm2685 = vcmp.gt.f32.partialorder %v2434, 0.0
      %vm2686 = vcmp.gt.f32.partialorder %v2514, 0.0
      %vm2687 = vcmp.gt.f32.partialorder %v2516, 0.0
      %vm2688 = vcmp.gt.f32.partialorder %v2596, 0.0
      %vm2689 = vcmp.gt.f32.partialorder %v2598, 0.0
      %vm2690 = vcmp.gt.f32.partialorder %v2678, 0.0
      %vm2691 = vcmp.gt.f32.partialorder %v2680, 0.0
      %v2692 = vmul.f32 %v2432, 0.2
      %v2693 = vmul.f32 %v2434, 0.2
      %v2694 = vmul.f32 %v2514, 0.2
      %v2695 = vmul.f32 %v2516, 0.2
      %v2696 = vmul.f32 %v2596, 0.2
      %v2697 = vmul.f32 %v2598, 0.2
      %v2698 = vmul.f32 %v2678, 0.2
      %v2699 = vmul.f32 %v2680, 0.2
      %v2700 = vsel %vm2684, %v2432, %v2692
      %v2701 = vsel %vm2685, %v2434, %v2693
      %v2702 = vsel %vm2686, %v2514, %v2694
      %v2703 = vsel %vm2687, %v2516, %v2695
      %v2704 = vsel %vm2688, %v2596, %v2696
      %v2705 = vsel %vm2689, %v2598, %v2697
      %v2706 = vsel %vm2690, %v2678, %v2698
      %v2707 = vsel %vm2691, %v2680, %v2699
      %v2708 = vpack.c.bf16 %v2700, %v2700
      %v2709 = vpack.c.bf16 %v2701, %v2701
      %v2710 = vpack.c.bf16 %v2702, %v2702
      %v2711 = vpack.c.bf16 %v2703, %v2703
      %v2712 = vpack.c.bf16 %v2704, %v2704
      %v2713 = vpack.c.bf16 %v2705, %v2705
      %v2714 = vpack.c.bf16 %v2706, %v2706
      %v2715 = vpack.c.bf16 %v2707, %v2707
      %v2724 = vunpack.c.l.b16 %v2708
      %v2725 = vunpack.c.l.b16 %v2709
      %v2726 = vunpack.c.l.b16 %v2710
      %v2727 = vunpack.c.l.b16 %v2711
      %v2728 = vunpack.c.l.b16 %v2712
      %v2729 = vunpack.c.l.b16 %v2713
      %v2730 = vunpack.c.l.b16 %v2714
      %v2731 = vunpack.c.l.b16 %v2715
      %v2732 = vpack.c.b16 %v2725, %v2724
      %v2733 = vpack.c.b16 %v2727, %v2726
      %v2734 = vpack.c.b16 %v2729, %v2728
      %v2735 = vpack.c.b16 %v2731, %v2730
      %2740 = vst [vmem:[#allocation2] sm:$0xff] %v2732
      %2741 = vst [vmem:[#allocation2 + $0x8] sm:$0xff] %v2733
      %2742 = vst [vmem:[#allocation2 + $0x10] sm:$0xff] %v2734
      %2743 = vst [vmem:[#allocation2 + $0x18] sm:$0xff] %v2735
    $region65: #{tpu_custom_call.1} parent=1 // pred_fallthru
      _
    %v2744 = vld [vmem:[#allocation2] sm:$0xff]
    %v2745 = vld [vmem:[#allocation2 + $0x8] sm:$0xff]
    %v2746 = vld [vmem:[#allocation2 + $0x10] sm:$0xff]
    %v2747 = vld [vmem:[#allocation2 + $0x18] sm:$0xff]
    %v2748 = vld [vmem:[#allocation12] sm:$0xf]
    %v2749 = vld [vmem:[#allocation12 + $0x4] sm:$0xf]
    %v2750 = vld [vmem:[#allocation12 + $0x8] sm:$0xf]
    %v2751 = vld [vmem:[#allocation12 + $0xc] sm:$0xf]
    %v2752 = vld [vmem:[#allocation12 + $0x10] sm:$0xf]
    %v2753 = vld [vmem:[#allocation12 + $0x14] sm:$0xf]
    %v2754 = vld [vmem:[#allocation12 + $0x18] sm:$0xf]
    %v2755 = vld [vmem:[#allocation12 + $0x1c] sm:$0xf]
    %v2756 = vld [vmem:[#allocation12 + $0x20] sm:$0xf]
    %v2757 = vld [vmem:[#allocation12 + $0x24] sm:$0xf]
    %v2758 = vld [vmem:[#allocation12 + $0x28] sm:$0xf]
    %v2759 = vld [vmem:[#allocation12 + $0x2c] sm:$0xf]
    %v2760 = vld [vmem:[#allocation12 + $0x30] sm:$0xf]
    %v2761 = vld [vmem:[#allocation12 + $0x34] sm:$0xf]
    %v2762 = vld [vmem:[#allocation12 + $0x38] sm:$0xf]
    %v2763 = vld [vmem:[#allocation12 + $0x3c] sm:$0xf]
    %v2764 = vld [vmem:[#allocation12 + $0x40] sm:$0xf]
    %v2765 = vld [vmem:[#allocation12 + $0x44] sm:$0xf]
    %v2766 = vld [vmem:[#allocation12 + $0x48] sm:$0xf]
    %v2767 = vld [vmem:[#allocation12 + $0x4c] sm:$0xf]
    %v2768 = vld [vmem:[#allocation12 + $0x50] sm:$0xf]
    %v2769 = vld [vmem:[#allocation12 + $0x54] sm:$0xf]
    %v2770 = vld [vmem:[#allocation12 + $0x58] sm:$0xf]
    %v2771 = vld [vmem:[#allocation12 + $0x5c] sm:$0xf]
    %v2772 = vld [vmem:[#allocation12 + $0x60] sm:$0xf]
    %v2773 = vld [vmem:[#allocation12 + $0x64] sm:$0xf]
    %v2774 = vld [vmem:[#allocation12 + $0x68] sm:$0xf]
    %v2775 = vld [vmem:[#allocation12 + $0x6c] sm:$0xf]
    %v2776 = vld [vmem:[#allocation12 + $0x70] sm:$0xf]
    %v2777 = vld [vmem:[#allocation12 + $0x74] sm:$0xf]
    %v2778 = vld [vmem:[#allocation12 + $0x78] sm:$0xf]
    %v2779 = vld [vmem:[#allocation12 + $0x7c] sm:$0xf]
    %v2780 = vld [vmem:[#allocation12 + $0x80] sm:$0xf]
    %v2781 = vld [vmem:[#allocation12 + $0x84] sm:$0xf]
    %v2782 = vld [vmem:[#allocation12 + $0x88] sm:$0xf]
    %v2783 = vld [vmem:[#allocation12 + $0x8c] sm:$0xf]
    %v2784 = vld [vmem:[#allocation12 + $0x90] sm:$0xf]
    %v2785 = vld [vmem:[#allocation12 + $0x94] sm:$0xf]
    %v2786 = vld [vmem:[#allocation12 + $0x98] sm:$0xf]
    %v2787 = vld [vmem:[#allocation12 + $0x9c] sm:$0xf]
    %v2788 = vld [vmem:[#allocation12 + $0xa0] sm:$0xf]
    %v2789 = vld [vmem:[#allocation12 + $0xa4] sm:$0xf]
    %v2790 = vld [vmem:[#allocation12 + $0xa8] sm:$0xf]
    %v2791 = vld [vmem:[#allocation12 + $0xac] sm:$0xf]
    %v2792 = vld [vmem:[#allocation12 + $0xb0] sm:$0xf]
    %v2793 = vld [vmem:[#allocation12 + $0xb4] sm:$0xf]
    %v2794 = vld [vmem:[#allocation12 + $0xb8] sm:$0xf]
    %v2795 = vld [vmem:[#allocation12 + $0xbc] sm:$0xf]
    %v2796 = vld [vmem:[#allocation12 + $0xc0] sm:$0xf]
    %v2797 = vld [vmem:[#allocation12 + $0xc4] sm:$0xf]
    %v2798 = vld [vmem:[#allocation12 + $0xc8] sm:$0xf]
    %v2799 = vld [vmem:[#allocation12 + $0xcc] sm:$0xf]
    %v2800 = vld [vmem:[#allocation12 + $0xd0] sm:$0xf]
    %v2801 = vld [vmem:[#allocation12 + $0xd4] sm:$0xf]
    %v2802 = vld [vmem:[#allocation12 + $0xd8] sm:$0xf]
    %v2803 = vld [vmem:[#allocation12 + $0xdc] sm:$0xf]
    %v2804 = vld [vmem:[#allocation12 + $0xe0] sm:$0xf]
    %v2805 = vld [vmem:[#allocation12 + $0xe4] sm:$0xf]
    %v2806 = vld [vmem:[#allocation12 + $0xe8] sm:$0xf]
    %v2807 = vld [vmem:[#allocation12 + $0xec] sm:$0xf]
    %v2808 = vld [vmem:[#allocation12 + $0xf0] sm:$0xf]
    %v2809 = vld [vmem:[#allocation12 + $0xf4] sm:$0xf]
    %v2810 = vld [vmem:[#allocation12 + $0xf8] sm:$0xf]
    %v2811 = vld [vmem:[#allocation12 + $0xfc] sm:$0xf]
    %v2812 = vld [vmem:[#allocation12 + $0x100] sm:$0xf]
    %v2813 = vld [vmem:[#allocation12 + $0x104] sm:$0xf]
    %v2814 = vld [vmem:[#allocation12 + $0x108] sm:$0xf]
    %v2815 = vld [vmem:[#allocation12 + $0x10c] sm:$0xf]
    %v2816 = vld [vmem:[#allocation12 + $0x110] sm:$0xf]
    %v2817 = vld [vmem:[#allocation12 + $0x114] sm:$0xf]
    %v2818 = vld [vmem:[#allocation12 + $0x118] sm:$0xf]
    %v2819 = vld [vmem:[#allocation12 + $0x11c] sm:$0xf]
    %v2820 = vld [vmem:[#allocation12 + $0x120] sm:$0xf]
    %v2821 = vld [vmem:[#allocation12 + $0x124] sm:$0xf]
    %v2822 = vld [vmem:[#allocation12 + $0x128] sm:$0xf]
    %v2823 = vld [vmem:[#allocation12 + $0x12c] sm:$0xf]
    %v2824 = vld [vmem:[#allocation12 + $0x130] sm:$0xf]
    %v2825 = vld [vmem:[#allocation12 + $0x134] sm:$0xf]
    %v2826 = vld [vmem:[#allocation12 + $0x138] sm:$0xf]
    %v2827 = vld [vmem:[#allocation12 + $0x13c] sm:$0xf]
    %v2828 = vld [vmem:[#allocation12 + $0x140] sm:$0xf]
    %v2829 = vld [vmem:[#allocation12 + $0x144] sm:$0xf]
    %v2830 = vld [vmem:[#allocation12 + $0x148] sm:$0xf]
    %v2831 = vld [vmem:[#allocation12 + $0x14c] sm:$0xf]
    %v2832 = vld [vmem:[#allocation12 + $0x150] sm:$0xf]
    %v2833 = vld [vmem:[#allocation12 + $0x154] sm:$0xf]
    %v2834 = vld [vmem:[#allocation12 + $0x158] sm:$0xf]
    %v2835 = vld [vmem:[#allocation12 + $0x15c] sm:$0xf]
    %v2836 = vld [vmem:[#allocation12 + $0x160] sm:$0xf]
    %v2837 = vld [vmem:[#allocation12 + $0x164] sm:$0xf]
    %v2838 = vld [vmem:[#allocation12 + $0x168] sm:$0xf]
    %v2839 = vld [vmem:[#allocation12 + $0x16c] sm:$0xf]
    %v2840 = vld [vmem:[#allocation12 + $0x170] sm:$0xf]
    %v2841 = vld [vmem:[#allocation12 + $0x174] sm:$0xf]
    %v2842 = vld [vmem:[#allocation12 + $0x178] sm:$0xf]
    %v2843 = vld [vmem:[#allocation12 + $0x17c] sm:$0xf]
    %v2844 = vld [vmem:[#allocation12 + $0x180] sm:$0xf]
    %v2845 = vld [vmem:[#allocation12 + $0x184] sm:$0xf]
    %v2846 = vld [vmem:[#allocation12 + $0x188] sm:$0xf]
    %v2847 = vld [vmem:[#allocation12 + $0x18c] sm:$0xf]
    %v2848 = vld [vmem:[#allocation12 + $0x190] sm:$0xf]
    %v2849 = vld [vmem:[#allocation12 + $0x194] sm:$0xf]
    %v2850 = vld [vmem:[#allocation12 + $0x198] sm:$0xf]
    %v2851 = vld [vmem:[#allocation12 + $0x19c] sm:$0xf]
    %v2852 = vld [vmem:[#allocation12 + $0x1a0] sm:$0xf]
    %v2853 = vld [vmem:[#allocation12 + $0x1a4] sm:$0xf]
    %v2854 = vld [vmem:[#allocation12 + $0x1a8] sm:$0xf]
    %v2855 = vld [vmem:[#allocation12 + $0x1ac] sm:$0xf]
    %v2856 = vld [vmem:[#allocation12 + $0x1b0] sm:$0xf]
    %v2857 = vld [vmem:[#allocation12 + $0x1b4] sm:$0xf]
    %v2858 = vld [vmem:[#allocation12 + $0x1b8] sm:$0xf]
    %v2859 = vld [vmem:[#allocation12 + $0x1bc] sm:$0xf]
    %v2860 = vld [vmem:[#allocation12 + $0x1c0] sm:$0xf]
    %v2861 = vld [vmem:[#allocation12 + $0x1c4] sm:$0xf]
    %v2862 = vld [vmem:[#allocation12 + $0x1c8] sm:$0xf]
    %v2863 = vld [vmem:[#allocation12 + $0x1cc] sm:$0xf]
    %v2864 = vld [vmem:[#allocation12 + $0x1d0] sm:$0xf]
    %v2865 = vld [vmem:[#allocation12 + $0x1d4] sm:$0xf]
    %v2866 = vld [vmem:[#allocation12 + $0x1d8] sm:$0xf]
    %v2867 = vld [vmem:[#allocation12 + $0x1dc] sm:$0xf]
    %v2868 = vld [vmem:[#allocation12 + $0x1e0] sm:$0xf]
    %v2869 = vld [vmem:[#allocation12 + $0x1e4] sm:$0xf]
    %v2870 = vld [vmem:[#allocation12 + $0x1e8] sm:$0xf]
    %v2871 = vld [vmem:[#allocation12 + $0x1ec] sm:$0xf]
    %v2872 = vld [vmem:[#allocation12 + $0x1f0] sm:$0xf]
    %v2873 = vld [vmem:[#allocation12 + $0x1f4] sm:$0xf]
    %v2874 = vld [vmem:[#allocation12 + $0x1f8] sm:$0xf]
    %v2875 = vld [vmem:[#allocation12 + $0x1fc] sm:$0xf]
    %v2876 = vld [vmem:[%s8] sm:$0x1]
    %v2878 = vlaneseq
    %v2879 = vshrl.u32 %v2878, 7
    %v2880 = vsub.s32 0, %v2879
    %v2881 = vrot.slane %v2876, %v2880
    %v2887 = vunpack.c.l.b16 %v2744
    %v2888 = vunpack.c.h.b16 %v2744
    %v2889 = vunpack.c.l.b16 %v2745
    %v2890 = vunpack.c.h.b16 %v2745
    %v2891 = vunpack.c.l.b16 %v2746
    %v2892 = vunpack.c.h.b16 %v2746
    %v2893 = vunpack.c.l.b16 %v2747
    %v2894 = vunpack.c.h.b16 %v2747
    %v2895 = vpack.c.b16 %v2887, %v2887
    %v2896 = vpack.c.b16 %v2888, %v2888
    %v2897 = vpack.c.b16 %v2889, %v2889
    %v2898 = vpack.c.b16 %v2890, %v2890
    %v2899 = vpack.c.b16 %v2891, %v2891
    %v2900 = vpack.c.b16 %v2892, %v2892
    %v2901 = vpack.c.b16 %v2893, %v2893
    %v2902 = vpack.c.b16 %v2894, %v2894
    %v3039 = vunpack.c.l.b16 %v2748
    %v3040 = vunpack.c.l.b16 %v2749
    %v3041 = vunpack.c.l.b16 %v2750
    %v3042 = vunpack.c.l.b16 %v2751
    %v3043 = vunpack.c.l.b16 %v2752
    %v3044 = vunpack.c.l.b16 %v2753
    %v3045 = vunpack.c.l.b16 %v2754
    %v3046 = vunpack.c.l.b16 %v2755
    %v3047 = vunpack.c.l.b16 %v2756
    %v3048 = vunpack.c.l.b16 %v2757
    %v3049 = vunpack.c.l.b16 %v2758
    %v3050 = vunpack.c.l.b16 %v2759
    %v3051 = vunpack.c.l.b16 %v2760
    %v3052 = vunpack.c.l.b16 %v2761
    %v3053 = vunpack.c.l.b16 %v2762
    %v3054 = vunpack.c.l.b16 %v2763
    %v3055 = vunpack.c.l.b16 %v2764
    %v3056 = vunpack.c.l.b16 %v2765
    %v3057 = vunpack.c.l.b16 %v2766
    %v3058 = vunpack.c.l.b16 %v2767
    %v3059 = vunpack.c.l.b16 %v2768
    %v3060 = vunpack.c.l.b16 %v2769
    %v3061 = vunpack.c.l.b16 %v2770
    %v3062 = vunpack.c.l.b16 %v2771
    %v3063 = vunpack.c.l.b16 %v2772
    %v3064 = vunpack.c.l.b16 %v2773
    %v3065 = vunpack.c.l.b16 %v2774
    %v3066 = vunpack.c.l.b16 %v2775
    %v3067 = vunpack.c.l.b16 %v2776
    %v3068 = vunpack.c.l.b16 %v2777
    %v3069 = vunpack.c.l.b16 %v2778
    %v3070 = vunpack.c.l.b16 %v2779
    %v3071 = vunpack.c.l.b16 %v2780
    %v3072 = vunpack.c.l.b16 %v2781
    %v3073 = vunpack.c.l.b16 %v2782
    %v3074 = vunpack.c.l.b16 %v2783
    %v3075 = vunpack.c.l.b16 %v2784
    %v3076 = vunpack.c.l.b16 %v2785
    %v3077 = vunpack.c.l.b16 %v2786
    %v3078 = vunpack.c.l.b16 %v2787
    %v3079 = vunpack.c.l.b16 %v2788
    %v3080 = vunpack.c.l.b16 %v2789
    %v3081 = vunpack.c.l.b16 %v2790
    %v3082 = vunpack.c.l.b16 %v2791
    %v3083 = vunpack.c.l.b16 %v2792
    %v3084 = vunpack.c.l.b16 %v2793
    %v3085 = vunpack.c.l.b16 %v2794
    %v3086 = vunpack.c.l.b16 %v2795
    %v3087 = vunpack.c.l.b16 %v2796
    %v3088 = vunpack.c.l.b16 %v2797
    %v3089 = vunpack.c.l.b16 %v2798
    %v3090 = vunpack.c.l.b16 %v2799
    %v3091 = vunpack.c.l.b16 %v2800
    %v3092 = vunpack.c.l.b16 %v2801
    %v3093 = vunpack.c.l.b16 %v2802
    %v3094 = vunpack.c.l.b16 %v2803
    %v3095 = vunpack.c.l.b16 %v2804
    %v3096 = vunpack.c.l.b16 %v2805
    %v3097 = vunpack.c.l.b16 %v2806
    %v3098 = vunpack.c.l.b16 %v2807
    %v3099 = vunpack.c.l.b16 %v2808
    %v3100 = vunpack.c.l.b16 %v2809
    %v3101 = vunpack.c.l.b16 %v2810
    %v3102 = vunpack.c.l.b16 %v2811
    %v3103 = vunpack.c.l.b16 %v2812
    %v3104 = vunpack.c.l.b16 %v2813
    %v3105 = vunpack.c.l.b16 %v2814
    %v3106 = vunpack.c.l.b16 %v2815
    %v3107 = vunpack.c.l.b16 %v2816
    %v3108 = vunpack.c.l.b16 %v2817
    %v3109 = vunpack.c.l.b16 %v2818
    %v3110 = vunpack.c.l.b16 %v2819
    %v3111 = vunpack.c.l.b16 %v2820
    %v3112 = vunpack.c.l.b16 %v2821
    %v3113 = vunpack.c.l.b16 %v2822
    %v3114 = vunpack.c.l.b16 %v2823
    %v3115 = vunpack.c.l.b16 %v2824
    %v3116 = vunpack.c.l.b16 %v2825
    %v3117 = vunpack.c.l.b16 %v2826
    %v3118 = vunpack.c.l.b16 %v2827
    %v3119 = vunpack.c.l.b16 %v2828
    %v3120 = vunpack.c.l.b16 %v2829
    %v3121 = vunpack.c.l.b16 %v2830
    %v3122 = vunpack.c.l.b16 %v2831
    %v3123 = vunpack.c.l.b16 %v2832
    %v3124 = vunpack.c.l.b16 %v2833
    %v3125 = vunpack.c.l.b16 %v2834
    %v3126 = vunpack.c.l.b16 %v2835
    %v3127 = vunpack.c.l.b16 %v2836
    %v3128 = vunpack.c.l.b16 %v2837
    %v3129 = vunpack.c.l.b16 %v2838
    %v3130 = vunpack.c.l.b16 %v2839
    %v3131 = vunpack.c.l.b16 %v2840
    %v3132 = vunpack.c.l.b16 %v2841
    %v3133 = vunpack.c.l.b16 %v2842
    %v3134 = vunpack.c.l.b16 %v2843
    %v3135 = vunpack.c.l.b16 %v2844
    %v3136 = vunpack.c.l.b16 %v2845
    %v3137 = vunpack.c.l.b16 %v2846
    %v3138 = vunpack.c.l.b16 %v2847
    %v3139 = vunpack.c.l.b16 %v2848
    %v3140 = vunpack.c.l.b16 %v2849
    %v3141 = vunpack.c.l.b16 %v2850
    %v3142 = vunpack.c.l.b16 %v2851
    %v3143 = vunpack.c.l.b16 %v2852
    %v3144 = vunpack.c.l.b16 %v2853
    %v3145 = vunpack.c.l.b16 %v2854
    %v3146 = vunpack.c.l.b16 %v2855
    %v3147 = vunpack.c.l.b16 %v2856
    %v3148 = vunpack.c.l.b16 %v2857
    %v3149 = vunpack.c.l.b16 %v2858
    %v3150 = vunpack.c.l.b16 %v2859
    %v3151 = vunpack.c.l.b16 %v2860
    %v3152 = vunpack.c.l.b16 %v2861
    %v3153 = vunpack.c.l.b16 %v2862
    %v3154 = vunpack.c.l.b16 %v2863
    %v3155 = vunpack.c.l.b16 %v2864
    %v3156 = vunpack.c.l.b16 %v2865
    %v3157 = vunpack.c.l.b16 %v2866
    %v3158 = vunpack.c.l.b16 %v2867
    %v3159 = vunpack.c.l.b16 %v2868
    %v3160 = vunpack.c.l.b16 %v2869
    %v3161 = vunpack.c.l.b16 %v2870
    %v3162 = vunpack.c.l.b16 %v2871
    %v3163 = vunpack.c.l.b16 %v2872
    %v3164 = vunpack.c.l.b16 %v2873
    %v3165 = vunpack.c.l.b16 %v2874
    %v3166 = vunpack.c.l.b16 %v2875
    %v3167 = vpack.c.b16 %v3040, %v3039
    %v3168 = vpack.c.b16 %v3042, %v3041
    %v3169 = vpack.c.b16 %v3044, %v3043
    %v3170 = vpack.c.b16 %v3046, %v3045
    %v3171 = vpack.c.b16 %v3048, %v3047
    %v3172 = vpack.c.b16 %v3050, %v3049
    %v3173 = vpack.c.b16 %v3052, %v3051
    %v3174 = vpack.c.b16 %v3054, %v3053
    %v3175 = vpack.c.b16 %v3056, %v3055
    %v3176 = vpack.c.b16 %v3058, %v3057
    %v3177 = vpack.c.b16 %v3060, %v3059
    %v3178 = vpack.c.b16 %v3062, %v3061
    %v3179 = vpack.c.b16 %v3064, %v3063
    %v3180 = vpack.c.b16 %v3066, %v3065
    %v3181 = vpack.c.b16 %v3068, %v3067
    %v3182 = vpack.c.b16 %v3070, %v3069
    %v3183 = vpack.c.b16 %v3072, %v3071
    %v3184 = vpack.c.b16 %v3074, %v3073
    %v3185 = vpack.c.b16 %v3076, %v3075
    %v3186 = vpack.c.b16 %v3078, %v3077
    %v3187 = vpack.c.b16 %v3080, %v3079
    %v3188 = vpack.c.b16 %v3082, %v3081
    %v3189 = vpack.c.b16 %v3084, %v3083
    %v3190 = vpack.c.b16 %v3086, %v3085
    %v3191 = vpack.c.b16 %v3088, %v3087
    %v3192 = vpack.c.b16 %v3090, %v3089
    %v3193 = vpack.c.b16 %v3092, %v3091
    %v3194 = vpack.c.b16 %v3094, %v3093
    %v3195 = vpack.c.b16 %v3096, %v3095
    %v3196 = vpack.c.b16 %v3098, %v3097
    %v3197 = vpack.c.b16 %v3100, %v3099
    %v3198 = vpack.c.b16 %v3102, %v3101
    %v3199 = vpack.c.b16 %v3104, %v3103
    %v3200 = vpack.c.b16 %v3106, %v3105
    %v3201 = vpack.c.b16 %v3108, %v3107
    %v3202 = vpack.c.b16 %v3110, %v3109
    %v3203 = vpack.c.b16 %v3112, %v3111
    %v3204 = vpack.c.b16 %v3114, %v3113
    %v3205 = vpack.c.b16 %v3116, %v3115
    %v3206 = vpack.c.b16 %v3118, %v3117
    %v3207 = vpack.c.b16 %v3120, %v3119
    %v3208 = vpack.c.b16 %v3122, %v3121
    %v3209 = vpack.c.b16 %v3124, %v3123
    %v3210 = vpack.c.b16 %v3126, %v3125
    %v3211 = vpack.c.b16 %v3128, %v3127
    %v3212 = vpack.c.b16 %v3130, %v3129
    %v3213 = vpack.c.b16 %v3132, %v3131
    %v3214 = vpack.c.b16 %v3134, %v3133
    %v3215 = vpack.c.b16 %v3136, %v3135
    %v3216 = vpack.c.b16 %v3138, %v3137
    %v3217 = vpack.c.b16 %v3140, %v3139
    %v3218 = vpack.c.b16 %v3142, %v3141
    %v3219 = vpack.c.b16 %v3144, %v3143
    %v3220 = vpack.c.b16 %v3146, %v3145
    %v3221 = vpack.c.b16 %v3148, %v3147
    %v3222 = vpack.c.b16 %v3150, %v3149
    %v3223 = vpack.c.b16 %v3152, %v3151
    %v3224 = vpack.c.b16 %v3154, %v3153
    %v3225 = vpack.c.b16 %v3156, %v3155
    %v3226 = vpack.c.b16 %v3158, %v3157
    %v3227 = vpack.c.b16 %v3160, %v3159
    %v3228 = vpack.c.b16 %v3162, %v3161
    %v3229 = vpack.c.b16 %v3164, %v3163
    %v3230 = vpack.c.b16 %v3166, %v3165
    %3295 = vmatprep.subr.bf16.mxu0 0
    %3296 = vmatpush1.bf16.msra.mxu0 %v3174
    %3297 = vmatprep.subr.bf16.mxu0 0
    %3298 = vmatpush1.bf16.msra.mxu0 %v3173
    %3299 = vmatprep.subr.bf16.mxu0 0
    %3300 = vmatpush1.bf16.msra.mxu0 %v3172
    %3301 = vmatprep.subr.bf16.mxu0 0
    %3302 = vmatpush1.bf16.msra.mxu0 %v3171
    %3303 = vmatprep.subr.bf16.mxu0 0
    %3304 = vmatpush1.bf16.msra.mxu0 %v3170
    %3305 = vmatprep.subr.bf16.mxu0 0
    %3306 = vmatpush1.bf16.msra.mxu0 %v3169
    %3307 = vmatprep.subr.bf16.mxu0 0
    %3308 = vmatpush1.bf16.msra.mxu0 %v3168
    %3309 = vmatprep.subr.bf16.mxu0 0
    %3310 = vmatpush1.bf16.msra.mxu0 %v3167
    %3311 = vmatprep.subr.bf16.mxu0 0
    %3312 = vmatpush2.bf16.msra.mxu0 %v3182
    %3313 = vmatprep.subr.bf16.mxu0 0
    %3314 = vmatpush2.bf16.msra.mxu0 %v3181
    %3315 = vmatprep.subr.bf16.mxu0 0
    %3316 = vmatpush2.bf16.msra.mxu0 %v3180
    %3317 = vmatprep.subr.bf16.mxu0 0
    %3318 = vmatpush2.bf16.msra.mxu0 %v3179
    %3319 = vmatprep.subr.bf16.mxu0 0
    %3320 = vmatpush2.bf16.msra.mxu0 %v3178
    %3321 = vmatprep.subr.bf16.mxu0 0
    %3322 = vmatpush2.bf16.msra.mxu0 %v3177
    %3323 = vmatprep.subr.bf16.mxu0 0
    %3324 = vmatpush2.bf16.msra.mxu0 %v3176
    %3325 = vmatprep.subr.bf16.mxu0 0
    %3326 = vmatpush2.bf16.msra.mxu0 %v3175
    %3327 = vmatprep.mubr.bf16.mxu0 %v2896
    %3328 = vmatmul.mubr.bf16.gmra.mxu0 %v2895
    %v3329 = vpop.f32.mrf.mxu0
    %v3330 = vadd.f32 %v2881, %v3329
    %v3331 = vpop.f32.mrf.mxu0
    %v3332 = vpop.f32.mrf.mxu0
    %v3333 = vpop.f32.mrf.mxu0
    %3334 = vdwg.mxu0
    %3335 = vmatprep.subr.bf16.mxu0 0
    %3336 = vmatpush1.bf16.msra.mxu0 %v3190
    %3337 = vmatprep.subr.bf16.mxu0 0
    %3338 = vmatpush1.bf16.msra.mxu0 %v3189
    %3339 = vmatprep.subr.bf16.mxu0 0
    %3340 = vmatpush1.bf16.msra.mxu0 %v3188
    %3341 = vmatprep.subr.bf16.mxu0 0
    %3342 = vmatpush1.bf16.msra.mxu0 %v3187
    %3343 = vmatprep.subr.bf16.mxu0 0
    %3344 = vmatpush1.bf16.msra.mxu0 %v3186
    %3345 = vmatprep.subr.bf16.mxu0 0
    %3346 = vmatpush1.bf16.msra.mxu0 %v3185
    %3347 = vmatprep.subr.bf16.mxu0 0
    %3348 = vmatpush1.bf16.msra.mxu0 %v3184
    %3349 = vmatprep.subr.bf16.mxu0 0
    %3350 = vmatpush1.bf16.msra.mxu0 %v3183
    %3351 = vmatprep.subr.bf16.mxu0 0
    %3352 = vmatpush2.bf16.msra.mxu0 %v3198
    %3353 = vmatprep.subr.bf16.mxu0 0
    %3354 = vmatpush2.bf16.msra.mxu0 %v3197
    %3355 = vmatprep.subr.bf16.mxu0 0
    %3356 = vmatpush2.bf16.msra.mxu0 %v3196
    %3357 = vmatprep.subr.bf16.mxu0 0
    %3358 = vmatpush2.bf16.msra.mxu0 %v3195
    %3359 = vmatprep.subr.bf16.mxu0 0
    %3360 = vmatpush2.bf16.msra.mxu0 %v3194
    %3361 = vmatprep.subr.bf16.mxu0 0
    %3362 = vmatpush2.bf16.msra.mxu0 %v3193
    %3363 = vmatprep.subr.bf16.mxu0 0
    %3364 = vmatpush2.bf16.msra.mxu0 %v3192
    %3365 = vmatprep.subr.bf16.mxu0 0
    %3366 = vmatpush2.bf16.msra.mxu0 %v3191
    %3367 = vmatprep.mubr.bf16.mxu0 %v2898
    %3368 = vmatmul.mubr.bf16.gmra.mxu0 %v2897
    %v3369 = vpop.f32.mrf.mxu0
    %v3370 = vadd.f32 %v3330, %v3369
    %v3371 = vpop.f32.mrf.mxu0
    %v3372 = vpop.f32.mrf.mxu0
    %v3373 = vpop.f32.mrf.mxu0
    %3374 = vdwg.mxu0
    %3375 = vmatprep.subr.bf16.mxu0 0
    %3376 = vmatpush1.bf16.msra.mxu0 %v3206
    %3377 = vmatprep.subr.bf16.mxu0 0
    %3378 = vmatpush1.bf16.msra.mxu0 %v3205
    %3379 = vmatprep.subr.bf16.mxu0 0
    %3380 = vmatpush1.bf16.msra.mxu0 %v3204
    %3381 = vmatprep.subr.bf16.mxu0 0
    %3382 = vmatpush1.bf16.msra.mxu0 %v3203
    %3383 = vmatprep.subr.bf16.mxu0 0
    %3384 = vmatpush1.bf16.msra.mxu0 %v3202
    %3385 = vmatprep.subr.bf16.mxu0 0
    %3386 = vmatpush1.bf16.msra.mxu0 %v3201
    %3387 = vmatprep.subr.bf16.mxu0 0
    %3388 = vmatpush1.bf16.msra.mxu0 %v3200
    %3389 = vmatprep.subr.bf16.mxu0 0
    %3390 = vmatpush1.bf16.msra.mxu0 %v3199
    %3391 = vmatprep.subr.bf16.mxu0 0
    %3392 = vmatpush2.bf16.msra.mxu0 %v3214
    %3393 = vmatprep.subr.bf16.mxu0 0
    %3394 = vmatpush2.bf16.msra.mxu0 %v3213
    %3395 = vmatprep.subr.bf16.mxu0 0
    %3396 = vmatpush2.bf16.msra.mxu0 %v3212
    %3397 = vmatprep.subr.bf16.mxu0 0
    %3398 = vmatpush2.bf16.msra.mxu0 %v3211
    %3399 = vmatprep.subr.bf16.mxu0 0
    %3400 = vmatpush2.bf16.msra.mxu0 %v3210
    %3401 = vmatprep.subr.bf16.mxu0 0
    %3402 = vmatpush2.bf16.msra.mxu0 %v3209
    %3403 = vmatprep.subr.bf16.mxu0 0
    %3404 = vmatpush2.bf16.msra.mxu0 %v3208
    %3405 = vmatprep.subr.bf16.mxu0 0
    %3406 = vmatpush2.bf16.msra.mxu0 %v3207
    %3407 = vmatprep.mubr.bf16.mxu0 %v2900
    %3408 = vmatmul.mubr.bf16.gmra.mxu0 %v2899
    %v3409 = vpop.f32.mrf.mxu0
    %v3410 = vadd.f32 %v3370, %v3409
    %v3411 = vpop.f32.mrf.mxu0
    %v3412 = vpop.f32.mrf.mxu0
    %v3413 = vpop.f32.mrf.mxu0
    %3414 = vdwg.mxu0
    %3415 = vmatprep.subr.bf16.mxu0 0
    %3416 = vmatpush1.bf16.msra.mxu0 %v3222
    %3417 = vmatprep.subr.bf16.mxu0 0
    %3418 = vmatpush1.bf16.msra.mxu0 %v3221
    %3419 = vmatprep.subr.bf16.mxu0 0
    %3420 = vmatpush1.bf16.msra.mxu0 %v3220
    %3421 = vmatprep.subr.bf16.mxu0 0
    %3422 = vmatpush1.bf16.msra.mxu0 %v3219
    %3423 = vmatprep.subr.bf16.mxu0 0
    %3424 = vmatpush1.bf16.msra.mxu0 %v3218
    %3425 = vmatprep.subr.bf16.mxu0 0
    %3426 = vmatpush1.bf16.msra.mxu0 %v3217
    %3427 = vmatprep.subr.bf16.mxu0 0
    %3428 = vmatpush1.bf16.msra.mxu0 %v3216
    %3429 = vmatprep.subr.bf16.mxu0 0
    %3430 = vmatpush1.bf16.msra.mxu0 %v3215
    %3431 = vmatprep.subr.bf16.mxu0 0
    %3432 = vmatpush2.bf16.msra.mxu0 %v3230
    %3433 = vmatprep.subr.bf16.mxu0 0
    %3434 = vmatpush2.bf16.msra.mxu0 %v3229
    %3435 = vmatprep.subr.bf16.mxu0 0
    %3436 = vmatpush2.bf16.msra.mxu0 %v3228
    %3437 = vmatprep.subr.bf16.mxu0 0
    %3438 = vmatpush2.bf16.msra.mxu0 %v3227
    %3439 = vmatprep.subr.bf16.mxu0 0
    %3440 = vmatpush2.bf16.msra.mxu0 %v3226
    %3441 = vmatprep.subr.bf16.mxu0 0
    %3442 = vmatpush2.bf16.msra.mxu0 %v3225
    %3443 = vmatprep.subr.bf16.mxu0 0
    %3444 = vmatpush2.bf16.msra.mxu0 %v3224
    %3445 = vmatprep.subr.bf16.mxu0 0
    %3446 = vmatpush2.bf16.msra.mxu0 %v3223
    %3447 = vmatprep.mubr.bf16.mxu0 %v2902
    %3448 = vmatmul.mubr.bf16.gmra.mxu0 %v2901
    %v3449 = vpop.f32.mrf.mxu0
    %v3450 = vadd.f32 %v3410, %v3449
    %v3451 = vpop.f32.mrf.mxu0
    %v3452 = vpop.f32.mrf.mxu0
    %v3453 = vpop.f32.mrf.mxu0
    %3454 = vdwg.mxu0
    %v3455 = vtanh.pop %v3450
    %v3456 = vpack.c.bf16 %v3455, %v3455
    %3457 = vst [vmem:[#allocation14] sm:$0xf] %v3456
    // Predicated region
    $region66: #{tpu_custom_call.1} parent=1 // pred_check
      _
    $region67: #{tpu_custom_call.1} parent=1 // pred_check_branch
      %3459 = sbr.rel (0) target = $region69
    $region68: #{tpu_custom_call.1} parent=1 // pred_region
      %s3461 = ssub.s32 64, 64
      %3462 = vsyncadd [#allocation5], %s3461
      %s3464 = sshll.u32 [#allocation14], 4
      %s3465 = int_to_ptr.vmem [resolvable:$true] %s3464
      %3467 = dma.vmem_to_hbm [thread:$0]  %s3465, 64, %s9, [#allocation5]
    $region69: #{tpu_custom_call.1} parent=1 // pred_fallthru
      _
    // Predicated region
    $region70: #{tpu_custom_call.1} parent=1 // pred_check
      _
    $region71: #{tpu_custom_call.1} parent=1 // pred_check_branch
      %3469 = sbr.rel (0) target = $region73
    $region72: #{tpu_custom_call.1} parent=1 // pred_region
      %3470 = dma.done [#allocation5], 64
    $region73: #{tpu_custom_call.1} parent=1 // pred_fallthru
      _
    %3471 = vsyncpa [#allocation4], 1
    %3472 = vsyncpa [#allocation7], 1
    %3473 = vsyncpa [#allocation10], 1
    %3474 = vsyncpa [#allocation13], 1
    %3475 = vsyncpa [#allocation5], 1

</llo_original>
